<compile_context>
chip_gen: v7x
topology: tpu7x:2x2x1
jax: 0.10.0
libtpu: 0.0.40
codegen_flags: <defaults>
</compile_context>

<pallas_src>
import jax
import jax.numpy as jnp
from jax.experimental import pallas as pl
from jax.experimental.pallas import tpu as pltpu


def _ru8(v: int) -> int:
    return ((v + 7) // 8) * 8


# ----------------------------- parameter layout -------------------------------

def _param_layout(N, O, He, Hd, S):
    lay = {}
    lay["wih_e"] = 0
    lay["whh_e"] = _ru8(N)
    lay["be"] = lay["whh_e"] + He
    lay["gscale"] = lay["be"] + 1
    lay["gshift"] = lay["be"] + 2
    lay["wih_d"] = _ru8(lay["gshift"] + 1)
    lay["whh_d"] = _ru8(lay["wih_d"] + O)
    lay["bd"] = lay["whh_d"] + Hd
    lay["vec"] = _ru8(lay["bd"] + 1)           # 7 rows of small vectors/scalars
    lay["awx"] = _ru8(lay["vec"] + 7)          # S rows, row t = awx[t] replicated
    lay["amask"] = lay["awx"] + S              # softmax lane mask (0 / -1e30)
    lay["rows"] = _ru8(lay["amask"] + 1)
    return lay


# --------------------------------- kernel -------------------------------------

def _make_kernel(*, S, Np, O, He, Hd, Bp, lay):
    HH = 2 * (He + Hd)

    def kernel(act_ref, w_ref, out_ref):
        # ---- gate activation constants (packed rows, shared He == Hd) ----
        gscale = w_ref[lay["gscale"]:lay["gscale"] + 1, :]     # (1, 4He)
        gshift = w_ref[lay["gshift"]:lay["gshift"] + 1, :]

        def lstm_cell(gates, c, H):
            # torch gate order i,f,g,o; sigmoid(z) = 0.5*tanh(0.5 z) + 0.5 so one
            # EUP tanh over the whole (Bp, 4H) vreg activates all four gates.
            a = jnp.tanh(gates * gscale) * gscale + gshift
            i = a[:, 0:H]
            f = a[:, H:2 * H]
            g = a[:, 2 * H:3 * H]
            o = a[:, 3 * H:4 * H]
            c_new = f * c + i * g
            return o * jnp.tanh(c_new), c_new

        # ---- activations: one blob = [h0 | x time-major | y time-major] ----
        h0 = act_ref[0:Bp, 0:HH]
        x_flat = act_ref[:, HH:HH + Np]               # (S*Bp, Np), pad lanes zero
        y_flat = act_ref[:, HH + Np:HH + Np + O]      # (S*Bp, O)

        # ---- encoder input attention (h/c/bias cancel -> time-invariant) ----
        awx = w_ref[lay["awx"]:lay["awx"] + S, 0:Np]           # row t = Wx[t]
        amask = w_ref[lay["amask"]:lay["amask"] + 1, 0:Np]     # 0 real / -1e30 pad
        e_x = amask
        for t in range(S):                                     # VALU MACs, unrolled
            e_x = e_x + x_flat[t * Bp:(t + 1) * Bp, :] * awx[t:t + 1, :]
        m = jnp.max(e_x, axis=1, keepdims=True)
        e = jnp.exp(e_x - m)
        attw = e / jnp.sum(e, axis=1, keepdims=True)           # exact, off-chain

        # ---- hoist all input-side LSTM gate work out of the time loops ----
        wih_e = w_ref[lay["wih_e"]:lay["wih_e"] + Np, :]       # zero-padded rows
        b_e = w_ref[lay["be"]:lay["be"] + 1, :]
        attw_all = jnp.concatenate([attw] * S, axis=0)         # (S*Bp, Np)
        gx_all = jnp.dot(x_flat * attw_all, wih_e,
                         preferred_element_type=jnp.float32) + b_e   # (S*Bp, 4He)

        v = lay["vec"]
        scal = w_ref[v + 6:v + 7, 0:4]
        e_fcb, d_fcb, d_fob, d_fcWy = (scal[:, 0:1], scal[:, 1:2],
                                       scal[:, 2:3], scal[:, 3:4])
        wih_d = w_ref[lay["wih_d"]:lay["wih_d"] + O, :]
        b_d = w_ref[lay["bd"]:lay["bd"] + 1, :]
        # decoder y-side gates are latent-independent -> built before the encoder
        # loop so they execute under the encoder's dependent chain.
        ygates_all = (y_flat * d_fcWy) * wih_d + b_d           # (S*Bp, 4Hd)

        # ---- encoder recurrence: one MXU dot + one EUP tanh per step ----
        whh_e = w_ref[lay["whh_e"]:lay["whh_e"] + He, :]
        h = h0[:, 0:He]
        c = h0[:, He:2 * He]
        for t in range(S):                                     # unrolled, S=8
            gates = gx_all[t * Bp:(t + 1) * Bp, :] + jnp.dot(
                h, whh_e, preferred_element_type=jnp.float32)
            h, c = lstm_cell(gates, c, He)

        # encoder fc (He -> 1): VPU multiply + lane reduce
        fcW_e = w_ref[v + 0:v + 1, 0:He]
        latent = jnp.sum(h * fcW_e, axis=1, keepdims=True) + e_fcb    # (Bp, 1)

        # ---- decoder; temporal attention is inert: context == expand(latent) ----
        expW = w_ref[v + 1:v + 2, 0:He]
        expb = w_ref[v + 2:v + 3, 0:He]
        fcWc_d = w_ref[v + 3:v + 4, 0:He]
        exp_vec = latent * expW + expb                         # (Bp, He) == context
        ctx_fc = jnp.sum(exp_vec * fcWc_d, axis=1, keepdims=True) + d_fcb
        ctx_gate = ctx_fc * wih_d                              # (Bp, 4Hd), built once

        whh_d = w_ref[lay["whh_d"]:lay["whh_d"] + Hd, :]
        hd = h0[:, 2 * He:2 * He + Hd]
        cd = h0[:, 2 * He + Hd:2 * He + 2 * Hd]
        for t in range(S):                                     # unrolled, S=8
            gates = (ygates_all[t * Bp:(t + 1) * Bp, :] + ctx_gate
                     + jnp.dot(hd, whh_d, preferred_element_type=jnp.float32))
            hd, cd = lstm_cell(gates, cd, Hd)

        # fc_out(cat(h_T, context)) with O == 1 -> two VPU mul + lane reduces
        foWh_d = w_ref[v + 4:v + 5, 0:Hd]
        foWc_d = w_ref[v + 5:v + 6, 0:He]
        out = (jnp.sum(hd * foWh_d, axis=1, keepdims=True)
               + jnp.sum(exp_vec * foWc_d, axis=1, keepdims=True) + d_fob)
        out_ref[...] = out.astype(out_ref.dtype)

    return kernel


# ---------------------------- host-side packing --------------------------------

def pack_params(params, seq_len):
    (e_Wih, e_Whh, e_b, e_aWh, e_aWc, e_aWx, e_ab, e_fcW, e_fcb,
     d_expW, d_expb, d_a1Wh, d_a1Wc, d_a1We, d_a1b, d_a2W, d_a2b,
     d_Wih, d_Whh, d_b, d_fcWc, d_fcWy, d_fcb, d_foWh, d_foWc, d_fob) = params
    # e_aWh / e_aWc / e_ab and the decoder attention MLP never influence the
    # forward output (softmax shift-invariance / uniform softmax over identical
    # logits), so they are not shipped to the kernel.
    del e_aWh, e_aWc, e_ab, d_a1Wh, d_a1Wc, d_a1We, d_a1b, d_a2W, d_a2b

    N = e_Wih.shape[0]
    He = e_Whh.shape[0]
    O = d_Wih.shape[0]
    Hd = d_Whh.shape[0]
    S = seq_len
    assert He == Hd and O == 1, "packing assumes He == Hd and output_size == 1"
    Np = _ru8(N)
    lay = _param_layout(N, O, He, Hd, S)

    W = jnp.zeros((lay["rows"], 4 * He), jnp.float32)
    W = W.at[lay["wih_e"]:lay["wih_e"] + N].set(e_Wih)
    W = W.at[lay["whh_e"]:lay["whh_e"] + He].set(e_Whh)
    W = W.at[lay["be"]].set(e_b[0])
    # gate activation constants: sigmoid lanes (i, f, o) scale/shift 0.5,
    # tanh lanes (g) scale 1.0 / shift 0.0
    half = jnp.full((He,), 0.5, jnp.float32)
    one = jnp.ones((He,), jnp.float32)
    zero = jnp.zeros((He,), jnp.float32)
    W = W.at[lay["gscale"]].set(jnp.concatenate([half, half, one, half]))
    W = W.at[lay["gshift"]].set(jnp.concatenate([half, half, zero, half]))
    W = W.at[lay["wih_d"]:lay["wih_d"] + O].set(d_Wih)
    W = W.at[lay["whh_d"]:lay["whh_d"] + Hd].set(d_Whh)
    W = W.at[lay["bd"]].set(d_b[0])
    v = lay["vec"]
    W = W.at[v + 0, 0:He].set(e_fcW[:, 0])
    W = W.at[v + 1, 0:He].set(d_expW[0])
    W = W.at[v + 2, 0:He].set(d_expb[0])
    W = W.at[v + 3, 0:He].set(d_fcWc[:, 0])
    W = W.at[v + 4, 0:Hd].set(d_foWh[:, 0])
    W = W.at[v + 5, 0:He].set(d_foWc[:, 0])
    W = W.at[v + 6, 0].set(e_fcb[0, 0])
    W = W.at[v + 6, 1].set(d_fcb[0, 0])
    W = W.at[v + 6, 2].set(d_fob[0, 0])
    W = W.at[v + 6, 3].set(d_fcWy[0, 0])
    W = W.at[lay["awx"]:lay["awx"] + S, 0:Np].set(
        jnp.broadcast_to(e_aWx[0, :, 0:1], (S, Np)))
    amask = jnp.full((4 * He,), -1e30, jnp.float32).at[0:N].set(0.0)
    W = W.at[lay["amask"]].set(amask)
    return W, lay


# -------------------------------- wrapper --------------------------------------

def autoenc_forecast(params, x, y_hist, enc_h0, enc_c0, dec_h0, dec_c0):
    B, S, N = x.shape
    O = y_hist.shape[-1]
    He = enc_h0.shape[-1]
    Hd = dec_h0.shape[-1]
    Bp = max(_ru8(B), 8)       # pad batch to the f32 sublane count
    Np = _ru8(N)
    HH = 2 * (He + Hd)

    W, lay = pack_params(params, S)

    # Single lane-dense activation blob: [h0 | x (time-major) | y (time-major)]
    # -> the kernel takes 2 inputs (2 DMAs) instead of 7.
    act = jnp.zeros((S * Bp, HH + Np + O), jnp.float32)
    h0 = jnp.concatenate([enc_h0, enc_c0, dec_h0, dec_c0], axis=1)     # (B, HH)
    act = act.at[0:B, 0:HH].set(h0)
    xp = jnp.zeros((Bp, S, N), jnp.float32).at[0:B].set(x)
    yp = jnp.zeros((Bp, S, O), jnp.float32).at[0:B].set(y_hist)
    act = act.at[:, HH:HH + N].set(jnp.transpose(xp, (1, 0, 2)).reshape(S * Bp, N))
    act = act.at[:, HH + Np:HH + Np + O].set(
        jnp.transpose(yp, (1, 0, 2)).reshape(S * Bp, O))

    kernel = _make_kernel(S=S, Np=Np, O=O, He=He, Hd=Hd, Bp=Bp, lay=lay)
    vmem = pl.BlockSpec(memory_space=pltpu.MemorySpace.VMEM)
    out = pl.pallas_call(
        kernel,
        out_shape=jax.ShapeDtypeStruct((Bp, O), jnp.float32),
        in_specs=[vmem, vmem],
        out_specs=vmem,
    )(act, W)
    return out[:B]


# ------------------------- deterministic parameter init ------------------------

def init_params(key, *, input_size, seq_len, He, Hd, O):
    keys = iter(jax.random.split(key, 64))

    def uniform(shape, bound):
        return jax.random.uniform(next(keys), shape, jnp.float32, -bound, bound)

    def normal(shape, std=1.0):
        return std * jax.random.normal(next(keys), shape, jnp.float32)

    # ---- encoder (AttnEncoder) ----
    k_lstm_e = 1.0 / (He ** 0.5)
    e_Wih = uniform((input_size, 4 * He), k_lstm_e)
    e_Whh = uniform((He, 4 * He), k_lstm_e)
    e_b = uniform((1, 4 * He), k_lstm_e) + uniform((1, 4 * He), k_lstm_e)  # b_ih + b_hh

    k_attn_e = 1.0 / ((2 * He + seq_len) ** 0.5)
    e_aWh = uniform((He, 1), k_attn_e)
    e_aWc = uniform((He, 1), k_attn_e)
    e_aWx = uniform((1, seq_len, 1), k_attn_e)
    e_ab = uniform((1, 1), k_attn_e)

    k_fc_e = 1.0 / (He ** 0.5)
    e_fcW = uniform((He, 1), k_fc_e)
    e_fcb = uniform((1, 1), k_fc_e)

    # ---- decoder (AttnDecoder) ----
    d_expW = uniform((1, He), 1.0)
    d_expb = uniform((1, He), 1.0)

    k_a1 = 1.0 / ((2 * Hd + He) ** 0.5)
    d_a1Wh = uniform((Hd, He), k_a1)
    d_a1Wc = uniform((Hd, He), k_a1)
    d_a1We = uniform((He, He), k_a1)
    d_a1b = uniform((1, He), k_a1)

    k_a2 = 1.0 / (He ** 0.5)
    d_a2W = uniform((He, 1), k_a2)
    d_a2b = uniform((1, 1), k_a2)

    k_lstm_d = 1.0 / (Hd ** 0.5)
    d_Wih = uniform((O, 4 * Hd), k_lstm_d)
    d_Whh = uniform((Hd, 4 * Hd), k_lstm_d)
    d_b = uniform((1, 4 * Hd), k_lstm_d) + uniform((1, 4 * Hd), k_lstm_d)

    d_fcWc = normal((He, O))
    d_fcWy = normal((O, O))
    d_fcb = uniform((1, O), 1.0 / ((He + O) ** 0.5))

    k_fo = 1.0 / ((Hd + He) ** 0.5)
    d_foWh = uniform((Hd, O), k_fo)
    d_foWc = uniform((He, O), k_fo)
    d_fob = uniform((1, O), k_fo)

    return (e_Wih, e_Whh, e_b, e_aWh, e_aWc, e_aWx, e_ab, e_fcW, e_fcb,
            d_expW, d_expb, d_a1Wh, d_a1Wc, d_a1We, d_a1b, d_a2W, d_a2b,
            d_Wih, d_Whh, d_b, d_fcWc, d_fcWy, d_fcb, d_foWh, d_foWc, d_fob)


def xavier_hidden(key, batch, hidden):
    # matches nn.init.xavier_normal_(torch.zeros(1, B, H)) up to RNG stream
    fan_in = batch * hidden
    fan_out = 1 * hidden
    std = (2.0 / (fan_in + fan_out)) ** 0.5
    return std * jax.random.normal(key, (batch, hidden), jnp.float32)


# ----------------------------------- main ---------------------------------------

if __name__ == "__main__":
    B, S, N = 2, 8, 4        # batch, seq_len, input_size
    He, Hd, O = 32, 32, 1    # hidden_size_encoder, hidden_size_decoder, output_size

    root = jax.random.PRNGKey(0)
    k_params, k_x, k_y, k_eh, k_ec, k_dh, k_dc = jax.random.split(root, 7)

    params = init_params(k_params, input_size=N, seq_len=S, He=He, Hd=Hd, O=O)

    x = jax.random.normal(k_x, (B, S, N), jnp.float32)       # encoder_input
    y_hist = jax.random.normal(k_y, (B, S, O), jnp.float32)  # shifted target

    # TODO(synk): the reference draws fresh xavier-normal hidden states from
    # torch's RNG on every forward call; here they are deterministic jax draws.
    enc_h0 = xavier_hidden(k_eh, B, He)
    enc_c0 = xavier_hidden(k_ec, B, He)
    dec_h0 = xavier_hidden(k_dh, B, Hd)
    dec_c0 = xavier_hidden(k_dc, B, Hd)

    out = autoenc_forecast(params, x, y_hist, enc_h0, enc_c0, dec_h0, dec_c0)
    out = jax.block_until_ready(out)
    assert out.shape == (B, O) and out.dtype == jnp.float32
    print("KERNEL_OK")
</pallas_src>

<mosaic_0001>
module attributes {stable_mosaic.version = 11 : i64} {
  func.func @kernel(%arg0: memref<64x137xf32, #tpu.memory_space<vmem>>, %arg1: memref<120x128xf32, #tpu.memory_space<vmem>>, %arg2: memref<8x1xf32, #tpu.memory_space<vmem>>) attributes {dimension_semantics = [], scalar_prefetch = 0 : i64, scratch_operands = 0 : i64, tpu.core_type = #tpu.core_type<tc>} {
    %c41 = arith.constant 41 : index
    %c0 = arith.constant 0 : index
    %0 = vector.load %arg1[%c41, %c0] : memref<120x128xf32, #tpu.memory_space<vmem>>, vector<1x128xf32>
    %c42 = arith.constant 42 : index
    %c0_0 = arith.constant 0 : index
    %1 = vector.load %arg1[%c42, %c0_0] : memref<120x128xf32, #tpu.memory_space<vmem>>, vector<1x128xf32>
    %c0_1 = arith.constant 0 : index
    %c0_2 = arith.constant 0 : index
    %2 = vector.load %arg0[%c0_1, %c0_2] : memref<64x137xf32, #tpu.memory_space<vmem>>, vector<8x128xf32>
    %c0_3 = arith.constant 0 : index
    %c128 = arith.constant 128 : index
    %3 = vector.load %arg0[%c0_3, %c128] : memref<64x137xf32, #tpu.memory_space<vmem>>, vector<64x8xf32>
    %c0_4 = arith.constant 0 : index
    %c136 = arith.constant 136 : index
    %4 = vector.load %arg0[%c0_4, %c136] : memref<64x137xf32, #tpu.memory_space<vmem>>, vector<64x1xf32>
    %c104 = arith.constant 104 : index
    %c0_5 = arith.constant 0 : index
    %5 = vector.load %arg1[%c104, %c0_5] : memref<120x128xf32, #tpu.memory_space<vmem>>, vector<8x8xf32>
    %c112 = arith.constant 112 : index
    %c0_6 = arith.constant 0 : index
    %6 = vector.load %arg1[%c112, %c0_6] : memref<120x128xf32, #tpu.memory_space<vmem>>, vector<1x8xf32>
    %7 = vector.extract_strided_slice %3 {offsets = [0, 0], sizes = [8, 8], strides = [1, 1]} : vector<64x8xf32> to vector<8x8xf32>
    %8 = vector.extract_strided_slice %5 {offsets = [0, 0], sizes = [1, 8], strides = [1, 1]} : vector<8x8xf32> to vector<1x8xf32>
    %9 = vector.broadcast %8 : vector<1x8xf32> to vector<8x8xf32>
    %10 = arith.mulf %7, %9 : vector<8x8xf32>
    %11 = vector.broadcast %6 : vector<1x8xf32> to vector<8x8xf32>
    %12 = arith.addf %11, %10 : vector<8x8xf32>
    %13 = vector.extract_strided_slice %3 {offsets = [8, 0], sizes = [8, 8], strides = [1, 1]} : vector<64x8xf32> to vector<8x8xf32>
    %14 = vector.extract_strided_slice %5 {offsets = [1, 0], sizes = [1, 8], strides = [1, 1]} : vector<8x8xf32> to vector<1x8xf32>
    %15 = vector.broadcast %14 : vector<1x8xf32> to vector<8x8xf32>
    %16 = arith.mulf %13, %15 : vector<8x8xf32>
    %17 = arith.addf %12, %16 : vector<8x8xf32>
    %18 = vector.extract_strided_slice %3 {offsets = [16, 0], sizes = [8, 8], strides = [1, 1]} : vector<64x8xf32> to vector<8x8xf32>
    %19 = vector.extract_strided_slice %5 {offsets = [2, 0], sizes = [1, 8], strides = [1, 1]} : vector<8x8xf32> to vector<1x8xf32>
    %20 = vector.broadcast %19 : vector<1x8xf32> to vector<8x8xf32>
    %21 = arith.mulf %18, %20 : vector<8x8xf32>
    %22 = arith.addf %17, %21 : vector<8x8xf32>
    %23 = vector.extract_strided_slice %3 {offsets = [24, 0], sizes = [8, 8], strides = [1, 1]} : vector<64x8xf32> to vector<8x8xf32>
    %24 = vector.extract_strided_slice %5 {offsets = [3, 0], sizes = [1, 8], strides = [1, 1]} : vector<8x8xf32> to vector<1x8xf32>
    %25 = vector.broadcast %24 : vector<1x8xf32> to vector<8x8xf32>
    %26 = arith.mulf %23, %25 : vector<8x8xf32>
    %27 = arith.addf %22, %26 : vector<8x8xf32>
    %28 = vector.extract_strided_slice %3 {offsets = [32, 0], sizes = [8, 8], strides = [1, 1]} : vector<64x8xf32> to vector<8x8xf32>
    %29 = vector.extract_strided_slice %5 {offsets = [4, 0], sizes = [1, 8], strides = [1, 1]} : vector<8x8xf32> to vector<1x8xf32>
    %30 = vector.broadcast %29 : vector<1x8xf32> to vector<8x8xf32>
    %31 = arith.mulf %28, %30 : vector<8x8xf32>
    %32 = arith.addf %27, %31 : vector<8x8xf32>
    %33 = vector.extract_strided_slice %3 {offsets = [40, 0], sizes = [8, 8], strides = [1, 1]} : vector<64x8xf32> to vector<8x8xf32>
    %34 = vector.extract_strided_slice %5 {offsets = [5, 0], sizes = [1, 8], strides = [1, 1]} : vector<8x8xf32> to vector<1x8xf32>
    %35 = vector.broadcast %34 : vector<1x8xf32> to vector<8x8xf32>
    %36 = arith.mulf %33, %35 : vector<8x8xf32>
    %37 = arith.addf %32, %36 : vector<8x8xf32>
    %38 = vector.extract_strided_slice %3 {offsets = [48, 0], sizes = [8, 8], strides = [1, 1]} : vector<64x8xf32> to vector<8x8xf32>
    %39 = vector.extract_strided_slice %5 {offsets = [6, 0], sizes = [1, 8], strides = [1, 1]} : vector<8x8xf32> to vector<1x8xf32>
    %40 = vector.broadcast %39 : vector<1x8xf32> to vector<8x8xf32>
    %41 = arith.mulf %38, %40 : vector<8x8xf32>
    %42 = arith.addf %37, %41 : vector<8x8xf32>
    %43 = vector.extract_strided_slice %3 {offsets = [56, 0], sizes = [8, 8], strides = [1, 1]} : vector<64x8xf32> to vector<8x8xf32>
    %44 = vector.extract_strided_slice %5 {offsets = [7, 0], sizes = [1, 8], strides = [1, 1]} : vector<8x8xf32> to vector<1x8xf32>
    %45 = vector.broadcast %44 : vector<1x8xf32> to vector<8x8xf32>
    %46 = arith.mulf %43, %45 : vector<8x8xf32>
    %47 = arith.addf %42, %46 : vector<8x8xf32>
    %cst = arith.constant dense<0xFF800000> : vector<8xf32>
    %48 = vector.multi_reduction <maximumf>, %47, %cst [1] : vector<8x8xf32> to vector<8xf32>
    %49 = vector.shape_cast %48 : vector<8xf32> to vector<8x1xf32>
    %50 = vector.broadcast %49 : vector<8x1xf32> to vector<8x8xf32>
    %51 = arith.subf %47, %50 : vector<8x8xf32>
    %52 = math.exp %51 : vector<8x8xf32>
    %cst_7 = arith.constant dense<0.000000e+00> : vector<8xf32>
    %53 = vector.multi_reduction <add>, %52, %cst_7 [1] : vector<8x8xf32> to vector<8xf32>
    %54 = vector.shape_cast %53 : vector<8xf32> to vector<8x1xf32>
    %55 = vector.broadcast %54 : vector<8x1xf32> to vector<8x8xf32>
    %56 = arith.divf %52, %55 : vector<8x8xf32>
    %c0_8 = arith.constant 0 : index
    %c0_9 = arith.constant 0 : index
    %57 = vector.load %arg1[%c0_8, %c0_9] : memref<120x128xf32, #tpu.memory_space<vmem>>, vector<8x128xf32>
    %c40 = arith.constant 40 : index
    %c0_10 = arith.constant 0 : index
    %58 = vector.load %arg1[%c40, %c0_10] : memref<120x128xf32, #tpu.memory_space<vmem>>, vector<1x128xf32>
    %59 = tpu.concatenate %56, %56, %56, %56, %56, %56, %56, %56 in 0 : vector<8x8xf32>, vector<8x8xf32>, vector<8x8xf32>, vector<8x8xf32>, vector<8x8xf32>, vector<8x8xf32>, vector<8x8xf32>, vector<8x8xf32> -> vector<64x8xf32>
    %60 = arith.mulf %3, %59 : vector<64x8xf32>
    %cst_11 = arith.constant dense<0.000000e+00> : vector<64x128xf32>
    %61 = tpu.matmul %60, %57, %cst_11 {dimension_numbers = #tpu.dot_dimension_numbers<[1], [0], [0], [1], [0, 0, 1, 1], [], []>} : vector<64x8xf32>, vector<8x128xf32>, vector<64x128xf32> -> vector<64x128xf32>
    %62 = vector.broadcast %58 : vector<1x128xf32> to vector<64x128xf32>
    %63 = arith.addf %61, %62 : vector<64x128xf32>
    %c102 = arith.constant 102 : index
    %c0_12 = arith.constant 0 : index
    %64 = vector.load %arg1[%c102, %c0_12] : memref<120x128xf32, #tpu.memory_space<vmem>>, vector<1x4xf32>
    %65 = vector.extract_strided_slice %64 {offsets = [0, 0], sizes = [1, 1], strides = [1, 1]} : vector<1x4xf32> to vector<1x1xf32>
    %66 = vector.extract_strided_slice %64 {offsets = [0, 1], sizes = [1, 1], strides = [1, 1]} : vector<1x4xf32> to vector<1x1xf32>
    %67 = vector.extract_strided_slice %64 {offsets = [0, 2], sizes = [1, 1], strides = [1, 1]} : vector<1x4xf32> to vector<1x1xf32>
    %68 = vector.extract_strided_slice %64 {offsets = [0, 3], sizes = [1, 1], strides = [1, 1]} : vector<1x4xf32> to vector<1x1xf32>
    %c48 = arith.constant 48 : index
    %c0_13 = arith.constant 0 : index
    %69 = vector.load %arg1[%c48, %c0_13] : memref<120x128xf32, #tpu.memory_space<vmem>>, vector<1x128xf32>
    %c88 = arith.constant 88 : index
    %c0_14 = arith.constant 0 : index
    %70 = vector.load %arg1[%c88, %c0_14] : memref<120x128xf32, #tpu.memory_space<vmem>>, vector<1x128xf32>
    %71 = vector.broadcast %68 : vector<1x1xf32> to vector<64x1xf32>
    %72 = arith.mulf %4, %71 : vector<64x1xf32>
    %73 = vector.broadcast %72 : vector<64x1xf32> to vector<64x128xf32>
    %74 = vector.broadcast %69 : vector<1x128xf32> to vector<64x128xf32>
    %75 = arith.mulf %73, %74 : vector<64x128xf32>
    %76 = vector.broadcast %70 : vector<1x128xf32> to vector<64x128xf32>
    %77 = arith.addf %75, %76 : vector<64x128xf32>
    %c8 = arith.constant 8 : index
    %c0_15 = arith.constant 0 : index
    %78 = vector.load %arg1[%c8, %c0_15] : memref<120x128xf32, #tpu.memory_space<vmem>>, vector<32x128xf32>
    %79 = vector.extract_strided_slice %2 {offsets = [0, 0], sizes = [8, 32], strides = [1, 1]} : vector<8x128xf32> to vector<8x32xf32>
    %80 = vector.extract_strided_slice %2 {offsets = [0, 32], sizes = [8, 32], strides = [1, 1]} : vector<8x128xf32> to vector<8x32xf32>
    %81 = vector.extract_strided_slice %63 {offsets = [0, 0], sizes = [8, 128], strides = [1, 1]} : vector<64x128xf32> to vector<8x128xf32>
    %cst_16 = arith.constant dense<0.000000e+00> : vector<8x128xf32>
    %82 = tpu.matmul %79, %78, %cst_16 {dimension_numbers = #tpu.dot_dimension_numbers<[1], [0], [0], [1], [0, 0, 1, 1], [], []>} : vector<8x32xf32>, vector<32x128xf32>, vector<8x128xf32> -> vector<8x128xf32>
    %83 = arith.addf %81, %82 : vector<8x128xf32>
    %84 = vector.broadcast %0 : vector<1x128xf32> to vector<8x128xf32>
    %85 = arith.mulf %83, %84 : vector<8x128xf32>
    %86 = math.tanh %85 : vector<8x128xf32>
    %87 = vector.broadcast %0 : vector<1x128xf32> to vector<8x128xf32>
    %88 = arith.mulf %86, %87 : vector<8x128xf32>
    %89 = vector.broadcast %1 : vector<1x128xf32> to vector<8x128xf32>
    %90 = arith.addf %88, %89 : vector<8x128xf32>
    %91 = vector.extract_strided_slice %90 {offsets = [0, 0], sizes = [8, 32], strides = [1, 1]} : vector<8x128xf32> to vector<8x32xf32>
    %92 = vector.extract_strided_slice %90 {offsets = [0, 32], sizes = [8, 32], strides = [1, 1]} : vector<8x128xf32> to vector<8x32xf32>
    %93 = vector.extract_strided_slice %90 {offsets = [0, 64], sizes = [8, 32], strides = [1, 1]} : vector<8x128xf32> to vector<8x32xf32>
    %94 = vector.extract_strided_slice %90 {offsets = [0, 96], sizes = [8, 32], strides = [1, 1]} : vector<8x128xf32> to vector<8x32xf32>
    %95 = arith.mulf %92, %80 : vector<8x32xf32>
    %96 = arith.mulf %91, %93 : vector<8x32xf32>
    %97 = arith.addf %95, %96 : vector<8x32xf32>
    %98 = math.tanh %97 : vector<8x32xf32>
    %99 = arith.mulf %94, %98 : vector<8x32xf32>
    %100 = vector.extract_strided_slice %63 {offsets = [8, 0], sizes = [8, 128], strides = [1, 1]} : vector<64x128xf32> to vector<8x128xf32>
    %cst_17 = arith.constant dense<0.000000e+00> : vector<8x128xf32>
    %101 = tpu.matmul %99, %78, %cst_17 {dimension_numbers = #tpu.dot_dimension_numbers<[1], [0], [0], [1], [0, 0, 1, 1], [], []>} : vector<8x32xf32>, vector<32x128xf32>, vector<8x128xf32> -> vector<8x128xf32>
    %102 = arith.addf %100, %101 : vector<8x128xf32>
    %103 = vector.broadcast %0 : vector<1x128xf32> to vector<8x128xf32>
    %104 = arith.mulf %102, %103 : vector<8x128xf32>
    %105 = math.tanh %104 : vector<8x128xf32>
    %106 = vector.broadcast %0 : vector<1x128xf32> to vector<8x128xf32>
    %107 = arith.mulf %105, %106 : vector<8x128xf32>
    %108 = vector.broadcast %1 : vector<1x128xf32> to vector<8x128xf32>
    %109 = arith.addf %107, %108 : vector<8x128xf32>
    %110 = vector.extract_strided_slice %109 {offsets = [0, 0], sizes = [8, 32], strides = [1, 1]} : vector<8x128xf32> to vector<8x32xf32>
    %111 = vector.extract_strided_slice %109 {offsets = [0, 32], sizes = [8, 32], strides = [1, 1]} : vector<8x128xf32> to vector<8x32xf32>
    %112 = vector.extract_strided_slice %109 {offsets = [0, 64], sizes = [8, 32], strides = [1, 1]} : vector<8x128xf32> to vector<8x32xf32>
    %113 = vector.extract_strided_slice %109 {offsets = [0, 96], sizes = [8, 32], strides = [1, 1]} : vector<8x128xf32> to vector<8x32xf32>
    %114 = arith.mulf %111, %97 : vector<8x32xf32>
    %115 = arith.mulf %110, %112 : vector<8x32xf32>
    %116 = arith.addf %114, %115 : vector<8x32xf32>
    %117 = math.tanh %116 : vector<8x32xf32>
    %118 = arith.mulf %113, %117 : vector<8x32xf32>
    %119 = vector.extract_strided_slice %63 {offsets = [16, 0], sizes = [8, 128], strides = [1, 1]} : vector<64x128xf32> to vector<8x128xf32>
    %cst_18 = arith.constant dense<0.000000e+00> : vector<8x128xf32>
    %120 = tpu.matmul %118, %78, %cst_18 {dimension_numbers = #tpu.dot_dimension_numbers<[1], [0], [0], [1], [0, 0, 1, 1], [], []>} : vector<8x32xf32>, vector<32x128xf32>, vector<8x128xf32> -> vector<8x128xf32>
    %121 = arith.addf %119, %120 : vector<8x128xf32>
    %122 = vector.broadcast %0 : vector<1x128xf32> to vector<8x128xf32>
    %123 = arith.mulf %121, %122 : vector<8x128xf32>
    %124 = math.tanh %123 : vector<8x128xf32>
    %125 = vector.broadcast %0 : vector<1x128xf32> to vector<8x128xf32>
    %126 = arith.mulf %124, %125 : vector<8x128xf32>
    %127 = vector.broadcast %1 : vector<1x128xf32> to vector<8x128xf32>
    %128 = arith.addf %126, %127 : vector<8x128xf32>
    %129 = vector.extract_strided_slice %128 {offsets = [0, 0], sizes = [8, 32], strides = [1, 1]} : vector<8x128xf32> to vector<8x32xf32>
    %130 = vector.extract_strided_slice %128 {offsets = [0, 32], sizes = [8, 32], strides = [1, 1]} : vector<8x128xf32> to vector<8x32xf32>
    %131 = vector.extract_strided_slice %128 {offsets = [0, 64], sizes = [8, 32], strides = [1, 1]} : vector<8x128xf32> to vector<8x32xf32>
    %132 = vector.extract_strided_slice %128 {offsets = [0, 96], sizes = [8, 32], strides = [1, 1]} : vector<8x128xf32> to vector<8x32xf32>
    %133 = arith.mulf %130, %116 : vector<8x32xf32>
    %134 = arith.mulf %129, %131 : vector<8x32xf32>
    %135 = arith.addf %133, %134 : vector<8x32xf32>
    %136 = math.tanh %135 : vector<8x32xf32>
    %137 = arith.mulf %132, %136 : vector<8x32xf32>
    %138 = vector.extract_strided_slice %63 {offsets = [24, 0], sizes = [8, 128], strides = [1, 1]} : vector<64x128xf32> to vector<8x128xf32>
    %cst_19 = arith.constant dense<0.000000e+00> : vector<8x128xf32>
    %139 = tpu.matmul %137, %78, %cst_19 {dimension_numbers = #tpu.dot_dimension_numbers<[1], [0], [0], [1], [0, 0, 1, 1], [], []>} : vector<8x32xf32>, vector<32x128xf32>, vector<8x128xf32> -> vector<8x128xf32>
    %140 = arith.addf %138, %139 : vector<8x128xf32>
    %141 = vector.broadcast %0 : vector<1x128xf32> to vector<8x128xf32>
    %142 = arith.mulf %140, %141 : vector<8x128xf32>
    %143 = math.tanh %142 : vector<8x128xf32>
    %144 = vector.broadcast %0 : vector<1x128xf32> to vector<8x128xf32>
    %145 = arith.mulf %143, %144 : vector<8x128xf32>
    %146 = vector.broadcast %1 : vector<1x128xf32> to vector<8x128xf32>
    %147 = arith.addf %145, %146 : vector<8x128xf32>
    %148 = vector.extract_strided_slice %147 {offsets = [0, 0], sizes = [8, 32], strides = [1, 1]} : vector<8x128xf32> to vector<8x32xf32>
    %149 = vector.extract_strided_slice %147 {offsets = [0, 32], sizes = [8, 32], strides = [1, 1]} : vector<8x128xf32> to vector<8x32xf32>
    %150 = vector.extract_strided_slice %147 {offsets = [0, 64], sizes = [8, 32], strides = [1, 1]} : vector<8x128xf32> to vector<8x32xf32>
    %151 = vector.extract_strided_slice %147 {offsets = [0, 96], sizes = [8, 32], strides = [1, 1]} : vector<8x128xf32> to vector<8x32xf32>
    %152 = arith.mulf %149, %135 : vector<8x32xf32>
    %153 = arith.mulf %148, %150 : vector<8x32xf32>
    %154 = arith.addf %152, %153 : vector<8x32xf32>
    %155 = math.tanh %154 : vector<8x32xf32>
    %156 = arith.mulf %151, %155 : vector<8x32xf32>
    %157 = vector.extract_strided_slice %63 {offsets = [32, 0], sizes = [8, 128], strides = [1, 1]} : vector<64x128xf32> to vector<8x128xf32>
    %cst_20 = arith.constant dense<0.000000e+00> : vector<8x128xf32>
    %158 = tpu.matmul %156, %78, %cst_20 {dimension_numbers = #tpu.dot_dimension_numbers<[1], [0], [0], [1], [0, 0, 1, 1], [], []>} : vector<8x32xf32>, vector<32x128xf32>, vector<8x128xf32> -> vector<8x128xf32>
    %159 = arith.addf %157, %158 : vector<8x128xf32>
    %160 = vector.broadcast %0 : vector<1x128xf32> to vector<8x128xf32>
    %161 = arith.mulf %159, %160 : vector<8x128xf32>
    %162 = math.tanh %161 : vector<8x128xf32>
    %163 = vector.broadcast %0 : vector<1x128xf32> to vector<8x128xf32>
    %164 = arith.mulf %162, %163 : vector<8x128xf32>
    %165 = vector.broadcast %1 : vector<1x128xf32> to vector<8x128xf32>
    %166 = arith.addf %164, %165 : vector<8x128xf32>
    %167 = vector.extract_strided_slice %166 {offsets = [0, 0], sizes = [8, 32], strides = [1, 1]} : vector<8x128xf32> to vector<8x32xf32>
    %168 = vector.extract_strided_slice %166 {offsets = [0, 32], sizes = [8, 32], strides = [1, 1]} : vector<8x128xf32> to vector<8x32xf32>
    %169 = vector.extract_strided_slice %166 {offsets = [0, 64], sizes = [8, 32], strides = [1, 1]} : vector<8x128xf32> to vector<8x32xf32>
    %170 = vector.extract_strided_slice %166 {offsets = [0, 96], sizes = [8, 32], strides = [1, 1]} : vector<8x128xf32> to vector<8x32xf32>
    %171 = arith.mulf %168, %154 : vector<8x32xf32>
    %172 = arith.mulf %167, %169 : vector<8x32xf32>
    %173 = arith.addf %171, %172 : vector<8x32xf32>
    %174 = math.tanh %173 : vector<8x32xf32>
    %175 = arith.mulf %170, %174 : vector<8x32xf32>
    %176 = vector.extract_strided_slice %63 {offsets = [40, 0], sizes = [8, 128], strides = [1, 1]} : vector<64x128xf32> to vector<8x128xf32>
    %cst_21 = arith.constant dense<0.000000e+00> : vector<8x128xf32>
    %177 = tpu.matmul %175, %78, %cst_21 {dimension_numbers = #tpu.dot_dimension_numbers<[1], [0], [0], [1], [0, 0, 1, 1], [], []>} : vector<8x32xf32>, vector<32x128xf32>, vector<8x128xf32> -> vector<8x128xf32>
    %178 = arith.addf %176, %177 : vector<8x128xf32>
    %179 = vector.broadcast %0 : vector<1x128xf32> to vector<8x128xf32>
    %180 = arith.mulf %178, %179 : vector<8x128xf32>
    %181 = math.tanh %180 : vector<8x128xf32>
    %182 = vector.broadcast %0 : vector<1x128xf32> to vector<8x128xf32>
    %183 = arith.mulf %181, %182 : vector<8x128xf32>
    %184 = vector.broadcast %1 : vector<1x128xf32> to vector<8x128xf32>
    %185 = arith.addf %183, %184 : vector<8x128xf32>
    %186 = vector.extract_strided_slice %185 {offsets = [0, 0], sizes = [8, 32], strides = [1, 1]} : vector<8x128xf32> to vector<8x32xf32>
    %187 = vector.extract_strided_slice %185 {offsets = [0, 32], sizes = [8, 32], strides = [1, 1]} : vector<8x128xf32> to vector<8x32xf32>
    %188 = vector.extract_strided_slice %185 {offsets = [0, 64], sizes = [8, 32], strides = [1, 1]} : vector<8x128xf32> to vector<8x32xf32>
    %189 = vector.extract_strided_slice %185 {offsets = [0, 96], sizes = [8, 32], strides = [1, 1]} : vector<8x128xf32> to vector<8x32xf32>
    %190 = arith.mulf %187, %173 : vector<8x32xf32>
    %191 = arith.mulf %186, %188 : vector<8x32xf32>
    %192 = arith.addf %190, %191 : vector<8x32xf32>
    %193 = math.tanh %192 : vector<8x32xf32>
    %194 = arith.mulf %189, %193 : vector<8x32xf32>
    %195 = vector.extract_strided_slice %63 {offsets = [48, 0], sizes = [8, 128], strides = [1, 1]} : vector<64x128xf32> to vector<8x128xf32>
    %cst_22 = arith.constant dense<0.000000e+00> : vector<8x128xf32>
    %196 = tpu.matmul %194, %78, %cst_22 {dimension_numbers = #tpu.dot_dimension_numbers<[1], [0], [0], [1], [0, 0, 1, 1], [], []>} : vector<8x32xf32>, vector<32x128xf32>, vector<8x128xf32> -> vector<8x128xf32>
    %197 = arith.addf %195, %196 : vector<8x128xf32>
    %198 = vector.broadcast %0 : vector<1x128xf32> to vector<8x128xf32>
    %199 = arith.mulf %197, %198 : vector<8x128xf32>
    %200 = math.tanh %199 : vector<8x128xf32>
    %201 = vector.broadcast %0 : vector<1x128xf32> to vector<8x128xf32>
    %202 = arith.mulf %200, %201 : vector<8x128xf32>
    %203 = vector.broadcast %1 : vector<1x128xf32> to vector<8x128xf32>
    %204 = arith.addf %202, %203 : vector<8x128xf32>
    %205 = vector.extract_strided_slice %204 {offsets = [0, 0], sizes = [8, 32], strides = [1, 1]} : vector<8x128xf32> to vector<8x32xf32>
    %206 = vector.extract_strided_slice %204 {offsets = [0, 32], sizes = [8, 32], strides = [1, 1]} : vector<8x128xf32> to vector<8x32xf32>
    %207 = vector.extract_strided_slice %204 {offsets = [0, 64], sizes = [8, 32], strides = [1, 1]} : vector<8x128xf32> to vector<8x32xf32>
    %208 = vector.extract_strided_slice %204 {offsets = [0, 96], sizes = [8, 32], strides = [1, 1]} : vector<8x128xf32> to vector<8x32xf32>
    %209 = arith.mulf %206, %192 : vector<8x32xf32>
    %210 = arith.mulf %205, %207 : vector<8x32xf32>
    %211 = arith.addf %209, %210 : vector<8x32xf32>
    %212 = math.tanh %211 : vector<8x32xf32>
    %213 = arith.mulf %208, %212 : vector<8x32xf32>
    %214 = vector.extract_strided_slice %63 {offsets = [56, 0], sizes = [8, 128], strides = [1, 1]} : vector<64x128xf32> to vector<8x128xf32>
    %cst_23 = arith.constant dense<0.000000e+00> : vector<8x128xf32>
    %215 = tpu.matmul %213, %78, %cst_23 {dimension_numbers = #tpu.dot_dimension_numbers<[1], [0], [0], [1], [0, 0, 1, 1], [], []>} : vector<8x32xf32>, vector<32x128xf32>, vector<8x128xf32> -> vector<8x128xf32>
    %216 = arith.addf %214, %215 : vector<8x128xf32>
    %217 = vector.broadcast %0 : vector<1x128xf32> to vector<8x128xf32>
    %218 = arith.mulf %216, %217 : vector<8x128xf32>
    %219 = math.tanh %218 : vector<8x128xf32>
    %220 = vector.broadcast %0 : vector<1x128xf32> to vector<8x128xf32>
    %221 = arith.mulf %219, %220 : vector<8x128xf32>
    %222 = vector.broadcast %1 : vector<1x128xf32> to vector<8x128xf32>
    %223 = arith.addf %221, %222 : vector<8x128xf32>
    %224 = vector.extract_strided_slice %223 {offsets = [0, 0], sizes = [8, 32], strides = [1, 1]} : vector<8x128xf32> to vector<8x32xf32>
    %225 = vector.extract_strided_slice %223 {offsets = [0, 32], sizes = [8, 32], strides = [1, 1]} : vector<8x128xf32> to vector<8x32xf32>
    %226 = vector.extract_strided_slice %223 {offsets = [0, 64], sizes = [8, 32], strides = [1, 1]} : vector<8x128xf32> to vector<8x32xf32>
    %227 = vector.extract_strided_slice %223 {offsets = [0, 96], sizes = [8, 32], strides = [1, 1]} : vector<8x128xf32> to vector<8x32xf32>
    %228 = arith.mulf %225, %211 : vector<8x32xf32>
    %229 = arith.mulf %224, %226 : vector<8x32xf32>
    %230 = arith.addf %228, %229 : vector<8x32xf32>
    %231 = math.tanh %230 : vector<8x32xf32>
    %232 = arith.mulf %227, %231 : vector<8x32xf32>
    %c96 = arith.constant 96 : index
    %c0_24 = arith.constant 0 : index
    %233 = vector.load %arg1[%c96, %c0_24] : memref<120x128xf32, #tpu.memory_space<vmem>>, vector<1x32xf32>
    %234 = vector.broadcast %233 : vector<1x32xf32> to vector<8x32xf32>
    %235 = arith.mulf %232, %234 : vector<8x32xf32>
    %cst_25 = arith.constant dense<0.000000e+00> : vector<8xf32>
    %236 = vector.multi_reduction <add>, %235, %cst_25 [1] : vector<8x32xf32> to vector<8xf32>
    %237 = vector.shape_cast %236 : vector<8xf32> to vector<8x1xf32>
    %238 = vector.broadcast %65 : vector<1x1xf32> to vector<8x1xf32>
    %239 = arith.addf %237, %238 : vector<8x1xf32>
    %c97 = arith.constant 97 : index
    %c0_26 = arith.constant 0 : index
    %240 = vector.load %arg1[%c97, %c0_26] : memref<120x128xf32, #tpu.memory_space<vmem>>, vector<1x32xf32>
    %c98 = arith.constant 98 : index
    %c0_27 = arith.constant 0 : index
    %241 = vector.load %arg1[%c98, %c0_27] : memref<120x128xf32, #tpu.memory_space<vmem>>, vector<1x32xf32>
    %c99 = arith.constant 99 : index
    %c0_28 = arith.constant 0 : index
    %242 = vector.load %arg1[%c99, %c0_28] : memref<120x128xf32, #tpu.memory_space<vmem>>, vector<1x32xf32>
    %243 = vector.broadcast %239 : vector<8x1xf32> to vector<8x32xf32>
    %244 = vector.broadcast %240 : vector<1x32xf32> to vector<8x32xf32>
    %245 = arith.mulf %243, %244 : vector<8x32xf32>
    %246 = vector.broadcast %241 : vector<1x32xf32> to vector<8x32xf32>
    %247 = arith.addf %245, %246 : vector<8x32xf32>
    %248 = vector.broadcast %242 : vector<1x32xf32> to vector<8x32xf32>
    %249 = arith.mulf %247, %248 : vector<8x32xf32>
    %cst_29 = arith.constant dense<0.000000e+00> : vector<8xf32>
    %250 = vector.multi_reduction <add>, %249, %cst_29 [1] : vector<8x32xf32> to vector<8xf32>
    %251 = vector.shape_cast %250 : vector<8xf32> to vector<8x1xf32>
    %252 = vector.broadcast %66 : vector<1x1xf32> to vector<8x1xf32>
    %253 = arith.addf %251, %252 : vector<8x1xf32>
    %254 = vector.broadcast %253 : vector<8x1xf32> to vector<8x128xf32>
    %255 = vector.broadcast %69 : vector<1x128xf32> to vector<8x128xf32>
    %256 = arith.mulf %254, %255 : vector<8x128xf32>
    %c56 = arith.constant 56 : index
    %c0_30 = arith.constant 0 : index
    %257 = vector.load %arg1[%c56, %c0_30] : memref<120x128xf32, #tpu.memory_space<vmem>>, vector<32x128xf32>
    %258 = vector.extract_strided_slice %2 {offsets = [0, 64], sizes = [8, 32], strides = [1, 1]} : vector<8x128xf32> to vector<8x32xf32>
    %259 = vector.extract_strided_slice %2 {offsets = [0, 96], sizes = [8, 32], strides = [1, 1]} : vector<8x128xf32> to vector<8x32xf32>
    %260 = vector.extract_strided_slice %77 {offsets = [0, 0], sizes = [8, 128], strides = [1, 1]} : vector<64x128xf32> to vector<8x128xf32>
    %261 = arith.addf %260, %256 : vector<8x128xf32>
    %cst_31 = arith.constant dense<0.000000e+00> : vector<8x128xf32>
    %262 = tpu.matmul %258, %257, %cst_31 {dimension_numbers = #tpu.dot_dimension_numbers<[1], [0], [0], [1], [0, 0, 1, 1], [], []>} : vector<8x32xf32>, vector<32x128xf32>, vector<8x128xf32> -> vector<8x128xf32>
    %263 = arith.addf %261, %262 : vector<8x128xf32>
    %264 = vector.broadcast %0 : vector<1x128xf32> to vector<8x128xf32>
    %265 = arith.mulf %263, %264 : vector<8x128xf32>
    %266 = math.tanh %265 : vector<8x128xf32>
    %267 = vector.broadcast %0 : vector<1x128xf32> to vector<8x128xf32>
    %268 = arith.mulf %266, %267 : vector<8x128xf32>
    %269 = vector.broadcast %1 : vector<1x128xf32> to vector<8x128xf32>
    %270 = arith.addf %268, %269 : vector<8x128xf32>
    %271 = vector.extract_strided_slice %270 {offsets = [0, 0], sizes = [8, 32], strides = [1, 1]} : vector<8x128xf32> to vector<8x32xf32>
    %272 = vector.extract_strided_slice %270 {offsets = [0, 32], sizes = [8, 32], strides = [1, 1]} : vector<8x128xf32> to vector<8x32xf32>
    %273 = vector.extract_strided_slice %270 {offsets = [0, 64], sizes = [8, 32], strides = [1, 1]} : vector<8x128xf32> to vector<8x32xf32>
    %274 = vector.extract_strided_slice %270 {offsets = [0, 96], sizes = [8, 32], strides = [1, 1]} : vector<8x128xf32> to vector<8x32xf32>
    %275 = arith.mulf %272, %259 : vector<8x32xf32>
    %276 = arith.mulf %271, %273 : vector<8x32xf32>
    %277 = arith.addf %275, %276 : vector<8x32xf32>
    %278 = math.tanh %277 : vector<8x32xf32>
    %279 = arith.mulf %274, %278 : vector<8x32xf32>
    %280 = vector.extract_strided_slice %77 {offsets = [8, 0], sizes = [8, 128], strides = [1, 1]} : vector<64x128xf32> to vector<8x128xf32>
    %281 = arith.addf %280, %256 : vector<8x128xf32>
    %cst_32 = arith.constant dense<0.000000e+00> : vector<8x128xf32>
    %282 = tpu.matmul %279, %257, %cst_32 {dimension_numbers = #tpu.dot_dimension_numbers<[1], [0], [0], [1], [0, 0, 1, 1], [], []>} : vector<8x32xf32>, vector<32x128xf32>, vector<8x128xf32> -> vector<8x128xf32>
    %283 = arith.addf %281, %282 : vector<8x128xf32>
    %284 = vector.broadcast %0 : vector<1x128xf32> to vector<8x128xf32>
    %285 = arith.mulf %283, %284 : vector<8x128xf32>
    %286 = math.tanh %285 : vector<8x128xf32>
    %287 = vector.broadcast %0 : vector<1x128xf32> to vector<8x128xf32>
    %288 = arith.mulf %286, %287 : vector<8x128xf32>
    %289 = vector.broadcast %1 : vector<1x128xf32> to vector<8x128xf32>
    %290 = arith.addf %288, %289 : vector<8x128xf32>
    %291 = vector.extract_strided_slice %290 {offsets = [0, 0], sizes = [8, 32], strides = [1, 1]} : vector<8x128xf32> to vector<8x32xf32>
    %292 = vector.extract_strided_slice %290 {offsets = [0, 32], sizes = [8, 32], strides = [1, 1]} : vector<8x128xf32> to vector<8x32xf32>
    %293 = vector.extract_strided_slice %290 {offsets = [0, 64], sizes = [8, 32], strides = [1, 1]} : vector<8x128xf32> to vector<8x32xf32>
    %294 = vector.extract_strided_slice %290 {offsets = [0, 96], sizes = [8, 32], strides = [1, 1]} : vector<8x128xf32> to vector<8x32xf32>
    %295 = arith.mulf %292, %277 : vector<8x32xf32>
    %296 = arith.mulf %291, %293 : vector<8x32xf32>
    %297 = arith.addf %295, %296 : vector<8x32xf32>
    %298 = math.tanh %297 : vector<8x32xf32>
    %299 = arith.mulf %294, %298 : vector<8x32xf32>
    %300 = vector.extract_strided_slice %77 {offsets = [16, 0], sizes = [8, 128], strides = [1, 1]} : vector<64x128xf32> to vector<8x128xf32>
    %301 = arith.addf %300, %256 : vector<8x128xf32>
    %cst_33 = arith.constant dense<0.000000e+00> : vector<8x128xf32>
    %302 = tpu.matmul %299, %257, %cst_33 {dimension_numbers = #tpu.dot_dimension_numbers<[1], [0], [0], [1], [0, 0, 1, 1], [], []>} : vector<8x32xf32>, vector<32x128xf32>, vector<8x128xf32> -> vector<8x128xf32>
    %303 = arith.addf %301, %302 : vector<8x128xf32>
    %304 = vector.broadcast %0 : vector<1x128xf32> to vector<8x128xf32>
    %305 = arith.mulf %303, %304 : vector<8x128xf32>
    %306 = math.tanh %305 : vector<8x128xf32>
    %307 = vector.broadcast %0 : vector<1x128xf32> to vector<8x128xf32>
    %308 = arith.mulf %306, %307 : vector<8x128xf32>
    %309 = vector.broadcast %1 : vector<1x128xf32> to vector<8x128xf32>
    %310 = arith.addf %308, %309 : vector<8x128xf32>
    %311 = vector.extract_strided_slice %310 {offsets = [0, 0], sizes = [8, 32], strides = [1, 1]} : vector<8x128xf32> to vector<8x32xf32>
    %312 = vector.extract_strided_slice %310 {offsets = [0, 32], sizes = [8, 32], strides = [1, 1]} : vector<8x128xf32> to vector<8x32xf32>
    %313 = vector.extract_strided_slice %310 {offsets = [0, 64], sizes = [8, 32], strides = [1, 1]} : vector<8x128xf32> to vector<8x32xf32>
    %314 = vector.extract_strided_slice %310 {offsets = [0, 96], sizes = [8, 32], strides = [1, 1]} : vector<8x128xf32> to vector<8x32xf32>
    %315 = arith.mulf %312, %297 : vector<8x32xf32>
    %316 = arith.mulf %311, %313 : vector<8x32xf32>
    %317 = arith.addf %315, %316 : vector<8x32xf32>
    %318 = math.tanh %317 : vector<8x32xf32>
    %319 = arith.mulf %314, %318 : vector<8x32xf32>
    %320 = vector.extract_strided_slice %77 {offsets = [24, 0], sizes = [8, 128], strides = [1, 1]} : vector<64x128xf32> to vector<8x128xf32>
    %321 = arith.addf %320, %256 : vector<8x128xf32>
    %cst_34 = arith.constant dense<0.000000e+00> : vector<8x128xf32>
    %322 = tpu.matmul %319, %257, %cst_34 {dimension_numbers = #tpu.dot_dimension_numbers<[1], [0], [0], [1], [0, 0, 1, 1], [], []>} : vector<8x32xf32>, vector<32x128xf32>, vector<8x128xf32> -> vector<8x128xf32>
    %323 = arith.addf %321, %322 : vector<8x128xf32>
    %324 = vector.broadcast %0 : vector<1x128xf32> to vector<8x128xf32>
    %325 = arith.mulf %323, %324 : vector<8x128xf32>
    %326 = math.tanh %325 : vector<8x128xf32>
    %327 = vector.broadcast %0 : vector<1x128xf32> to vector<8x128xf32>
    %328 = arith.mulf %326, %327 : vector<8x128xf32>
    %329 = vector.broadcast %1 : vector<1x128xf32> to vector<8x128xf32>
    %330 = arith.addf %328, %329 : vector<8x128xf32>
    %331 = vector.extract_strided_slice %330 {offsets = [0, 0], sizes = [8, 32], strides = [1, 1]} : vector<8x128xf32> to vector<8x32xf32>
    %332 = vector.extract_strided_slice %330 {offsets = [0, 32], sizes = [8, 32], strides = [1, 1]} : vector<8x128xf32> to vector<8x32xf32>
    %333 = vector.extract_strided_slice %330 {offsets = [0, 64], sizes = [8, 32], strides = [1, 1]} : vector<8x128xf32> to vector<8x32xf32>
    %334 = vector.extract_strided_slice %330 {offsets = [0, 96], sizes = [8, 32], strides = [1, 1]} : vector<8x128xf32> to vector<8x32xf32>
    %335 = arith.mulf %332, %317 : vector<8x32xf32>
    %336 = arith.mulf %331, %333 : vector<8x32xf32>
    %337 = arith.addf %335, %336 : vector<8x32xf32>
    %338 = math.tanh %337 : vector<8x32xf32>
    %339 = arith.mulf %334, %338 : vector<8x32xf32>
    %340 = vector.extract_strided_slice %77 {offsets = [32, 0], sizes = [8, 128], strides = [1, 1]} : vector<64x128xf32> to vector<8x128xf32>
    %341 = arith.addf %340, %256 : vector<8x128xf32>
    %cst_35 = arith.constant dense<0.000000e+00> : vector<8x128xf32>
    %342 = tpu.matmul %339, %257, %cst_35 {dimension_numbers = #tpu.dot_dimension_numbers<[1], [0], [0], [1], [0, 0, 1, 1], [], []>} : vector<8x32xf32>, vector<32x128xf32>, vector<8x128xf32> -> vector<8x128xf32>
    %343 = arith.addf %341, %342 : vector<8x128xf32>
    %344 = vector.broadcast %0 : vector<1x128xf32> to vector<8x128xf32>
    %345 = arith.mulf %343, %344 : vector<8x128xf32>
    %346 = math.tanh %345 : vector<8x128xf32>
    %347 = vector.broadcast %0 : vector<1x128xf32> to vector<8x128xf32>
    %348 = arith.mulf %346, %347 : vector<8x128xf32>
    %349 = vector.broadcast %1 : vector<1x128xf32> to vector<8x128xf32>
    %350 = arith.addf %348, %349 : vector<8x128xf32>
    %351 = vector.extract_strided_slice %350 {offsets = [0, 0], sizes = [8, 32], strides = [1, 1]} : vector<8x128xf32> to vector<8x32xf32>
    %352 = vector.extract_strided_slice %350 {offsets = [0, 32], sizes = [8, 32], strides = [1, 1]} : vector<8x128xf32> to vector<8x32xf32>
    %353 = vector.extract_strided_slice %350 {offsets = [0, 64], sizes = [8, 32], strides = [1, 1]} : vector<8x128xf32> to vector<8x32xf32>
    %354 = vector.extract_strided_slice %350 {offsets = [0, 96], sizes = [8, 32], strides = [1, 1]} : vector<8x128xf32> to vector<8x32xf32>
    %355 = arith.mulf %352, %337 : vector<8x32xf32>
    %356 = arith.mulf %351, %353 : vector<8x32xf32>
    %357 = arith.addf %355, %356 : vector<8x32xf32>
    %358 = math.tanh %357 : vector<8x32xf32>
    %359 = arith.mulf %354, %358 : vector<8x32xf32>
    %360 = vector.extract_strided_slice %77 {offsets = [40, 0], sizes = [8, 128], strides = [1, 1]} : vector<64x128xf32> to vector<8x128xf32>
    %361 = arith.addf %360, %256 : vector<8x128xf32>
    %cst_36 = arith.constant dense<0.000000e+00> : vector<8x128xf32>
    %362 = tpu.matmul %359, %257, %cst_36 {dimension_numbers = #tpu.dot_dimension_numbers<[1], [0], [0], [1], [0, 0, 1, 1], [], []>} : vector<8x32xf32>, vector<32x128xf32>, vector<8x128xf32> -> vector<8x128xf32>
    %363 = arith.addf %361, %362 : vector<8x128xf32>
    %364 = vector.broadcast %0 : vector<1x128xf32> to vector<8x128xf32>
    %365 = arith.mulf %363, %364 : vector<8x128xf32>
    %366 = math.tanh %365 : vector<8x128xf32>
    %367 = vector.broadcast %0 : vector<1x128xf32> to vector<8x128xf32>
    %368 = arith.mulf %366, %367 : vector<8x128xf32>
    %369 = vector.broadcast %1 : vector<1x128xf32> to vector<8x128xf32>
    %370 = arith.addf %368, %369 : vector<8x128xf32>
    %371 = vector.extract_strided_slice %370 {offsets = [0, 0], sizes = [8, 32], strides = [1, 1]} : vector<8x128xf32> to vector<8x32xf32>
    %372 = vector.extract_strided_slice %370 {offsets = [0, 32], sizes = [8, 32], strides = [1, 1]} : vector<8x128xf32> to vector<8x32xf32>
    %373 = vector.extract_strided_slice %370 {offsets = [0, 64], sizes = [8, 32], strides = [1, 1]} : vector<8x128xf32> to vector<8x32xf32>
    %374 = vector.extract_strided_slice %370 {offsets = [0, 96], sizes = [8, 32], strides = [1, 1]} : vector<8x128xf32> to vector<8x32xf32>
    %375 = arith.mulf %372, %357 : vector<8x32xf32>
    %376 = arith.mulf %371, %373 : vector<8x32xf32>
    %377 = arith.addf %375, %376 : vector<8x32xf32>
    %378 = math.tanh %377 : vector<8x32xf32>
    %379 = arith.mulf %374, %378 : vector<8x32xf32>
    %380 = vector.extract_strided_slice %77 {offsets = [48, 0], sizes = [8, 128], strides = [1, 1]} : vector<64x128xf32> to vector<8x128xf32>
    %381 = arith.addf %380, %256 : vector<8x128xf32>
    %cst_37 = arith.constant dense<0.000000e+00> : vector<8x128xf32>
    %382 = tpu.matmul %379, %257, %cst_37 {dimension_numbers = #tpu.dot_dimension_numbers<[1], [0], [0], [1], [0, 0, 1, 1], [], []>} : vector<8x32xf32>, vector<32x128xf32>, vector<8x128xf32> -> vector<8x128xf32>
    %383 = arith.addf %381, %382 : vector<8x128xf32>
    %384 = vector.broadcast %0 : vector<1x128xf32> to vector<8x128xf32>
    %385 = arith.mulf %383, %384 : vector<8x128xf32>
    %386 = math.tanh %385 : vector<8x128xf32>
    %387 = vector.broadcast %0 : vector<1x128xf32> to vector<8x128xf32>
    %388 = arith.mulf %386, %387 : vector<8x128xf32>
    %389 = vector.broadcast %1 : vector<1x128xf32> to vector<8x128xf32>
    %390 = arith.addf %388, %389 : vector<8x128xf32>
    %391 = vector.extract_strided_slice %390 {offsets = [0, 0], sizes = [8, 32], strides = [1, 1]} : vector<8x128xf32> to vector<8x32xf32>
    %392 = vector.extract_strided_slice %390 {offsets = [0, 32], sizes = [8, 32], strides = [1, 1]} : vector<8x128xf32> to vector<8x32xf32>
    %393 = vector.extract_strided_slice %390 {offsets = [0, 64], sizes = [8, 32], strides = [1, 1]} : vector<8x128xf32> to vector<8x32xf32>
    %394 = vector.extract_strided_slice %390 {offsets = [0, 96], sizes = [8, 32], strides = [1, 1]} : vector<8x128xf32> to vector<8x32xf32>
    %395 = arith.mulf %392, %377 : vector<8x32xf32>
    %396 = arith.mulf %391, %393 : vector<8x32xf32>
    %397 = arith.addf %395, %396 : vector<8x32xf32>
    %398 = math.tanh %397 : vector<8x32xf32>
    %399 = arith.mulf %394, %398 : vector<8x32xf32>
    %400 = vector.extract_strided_slice %77 {offsets = [56, 0], sizes = [8, 128], strides = [1, 1]} : vector<64x128xf32> to vector<8x128xf32>
    %401 = arith.addf %400, %256 : vector<8x128xf32>
    %cst_38 = arith.constant dense<0.000000e+00> : vector<8x128xf32>
    %402 = tpu.matmul %399, %257, %cst_38 {dimension_numbers = #tpu.dot_dimension_numbers<[1], [0], [0], [1], [0, 0, 1, 1], [], []>} : vector<8x32xf32>, vector<32x128xf32>, vector<8x128xf32> -> vector<8x128xf32>
    %403 = arith.addf %401, %402 : vector<8x128xf32>
    %404 = vector.broadcast %0 : vector<1x128xf32> to vector<8x128xf32>
    %405 = arith.mulf %403, %404 : vector<8x128xf32>
    %406 = math.tanh %405 : vector<8x128xf32>
    %407 = vector.broadcast %0 : vector<1x128xf32> to vector<8x128xf32>
    %408 = arith.mulf %406, %407 : vector<8x128xf32>
    %409 = vector.broadcast %1 : vector<1x128xf32> to vector<8x128xf32>
    %410 = arith.addf %408, %409 : vector<8x128xf32>
    %411 = vector.extract_strided_slice %410 {offsets = [0, 0], sizes = [8, 32], strides = [1, 1]} : vector<8x128xf32> to vector<8x32xf32>
    %412 = vector.extract_strided_slice %410 {offsets = [0, 32], sizes = [8, 32], strides = [1, 1]} : vector<8x128xf32> to vector<8x32xf32>
    %413 = vector.extract_strided_slice %410 {offsets = [0, 64], sizes = [8, 32], strides = [1, 1]} : vector<8x128xf32> to vector<8x32xf32>
    %414 = vector.extract_strided_slice %410 {offsets = [0, 96], sizes = [8, 32], strides = [1, 1]} : vector<8x128xf32> to vector<8x32xf32>
    %415 = arith.mulf %412, %397 : vector<8x32xf32>
    %416 = arith.mulf %411, %413 : vector<8x32xf32>
    %417 = arith.addf %415, %416 : vector<8x32xf32>
    %418 = math.tanh %417 : vector<8x32xf32>
    %419 = arith.mulf %414, %418 : vector<8x32xf32>
    %c100 = arith.constant 100 : index
    %c0_39 = arith.constant 0 : index
    %420 = vector.load %arg1[%c100, %c0_39] : memref<120x128xf32, #tpu.memory_space<vmem>>, vector<1x32xf32>
    %c101 = arith.constant 101 : index
    %c0_40 = arith.constant 0 : index
    %421 = vector.load %arg1[%c101, %c0_40] : memref<120x128xf32, #tpu.memory_space<vmem>>, vector<1x32xf32>
    %422 = vector.broadcast %420 : vector<1x32xf32> to vector<8x32xf32>
    %423 = arith.mulf %419, %422 : vector<8x32xf32>
    %cst_41 = arith.constant dense<0.000000e+00> : vector<8xf32>
    %424 = vector.multi_reduction <add>, %423, %cst_41 [1] : vector<8x32xf32> to vector<8xf32>
    %425 = vector.shape_cast %424 : vector<8xf32> to vector<8x1xf32>
    %426 = vector.broadcast %421 : vector<1x32xf32> to vector<8x32xf32>
    %427 = arith.mulf %247, %426 : vector<8x32xf32>
    %cst_42 = arith.constant dense<0.000000e+00> : vector<8xf32>
    %428 = vector.multi_reduction <add>, %427, %cst_42 [1] : vector<8x32xf32> to vector<8xf32>
    %429 = vector.shape_cast %428 : vector<8xf32> to vector<8x1xf32>
    %430 = arith.addf %425, %429 : vector<8x1xf32>
    %431 = vector.broadcast %67 : vector<1x1xf32> to vector<8x1xf32>
    %432 = arith.addf %430, %431 : vector<8x1xf32>
    %c0_43 = arith.constant 0 : index
    %c0_44 = arith.constant 0 : index
    %433 = vector.load %arg2[%c0_43, %c0_44] : memref<8x1xf32, #tpu.memory_space<vmem>>, vector<8x1xf32>
    tpu.vector_store %arg2[%c0_43, %c0_44], %432 {strides = array<i32>} : memref<8x1xf32, #tpu.memory_space<vmem>>, vector<8x1xf32>,
    return
  }
}

</mosaic_0001>

<llo_original>
// kernel: tpu_custom_call.1
$region0: #{tpu_custom_call.1}
  #allocation0 [shape = 'u32[]', space=smem, size = 0x4, offset = 0x4, fixed_abs, tag = 'smem constant byte address 0x4 - core index']
  #allocation1 [shape = 'u32[144,128]{1,0:T(1,128)}', space=vmem, size = 0x12000, scoped, tag = 'internal scratch']
  %s0 = inlined_call_operand.hbm [shape: f32[64,137], index: 0, kind: input, shape index: {}]
  %s1 = inlined_call_operand.hbm [shape: f32[120,128], index: 1, kind: input, shape index: {}]
  %s2 = inlined_call_operand.vmem [shape: f32[8,1], index: 2, kind: output, shape index: {}]
  %s3 = sld [smem:[#allocation0]]
  $region26: #{tpu_custom_call.1} parent=0
    _
  %s5 = ssub.s32 1, %s3
  %s6 = scalar_select 0, %s5, %s3
  $region1: #{tpu_custom_call.1} parent=0
    #allocation2 [shape = 'u8[65536]{0}', space=vmem, size = 0x10000, scoped, tag = 'input window, operand 0, single buffered']
    #allocation3 [shape = 's32[1]{0}', space=sflag, size = 0x4, scoped, tag = 'scoped memory for tpu_custom_call.1']
    #allocation4 [shape = 'u8[61440]{0}', space=vmem, size = 0xf000, scoped, tag = 'input window, operand 1, single buffered']
    #allocation5 [shape = 's32[1]{0}', space=sflag, size = 0x4, scoped, tag = 'scoped memory for tpu_custom_call.1']
    %7 = vsyncpa [#allocation3], 0
    %8 = vsyncpa [#allocation5], 0
    // Predicated region
    $region2: #{tpu_custom_call.1} parent=1 // pred_check
      _
    $region3: #{tpu_custom_call.1} parent=1 // pred_check_branch
      %10 = sbr.rel (0) target = $region5
    $region4: #{tpu_custom_call.1} parent=1 // pred_region
      %s12 = ssub.s32 2048, 2048
      %13 = vsyncadd [#allocation3], %s12
      %s14 = sshll.u32 [#allocation2], 4
      %s15 = int_to_ptr.vmem [resolvable:$true] %s14
      %20 = dma.hbm_to_vmem [thread:$0]  %s0, 2048, %s15, [#allocation3], 256, 256, 16
    $region5: #{tpu_custom_call.1} parent=1 // pred_fallthru
      _
    // Predicated region
    $region6: #{tpu_custom_call.1} parent=1 // pred_check
      _
    $region7: #{tpu_custom_call.1} parent=1 // pred_check_branch
      %22 = sbr.rel (0) target = $region9
    $region8: #{tpu_custom_call.1} parent=1 // pred_region
      %s24 = ssub.s32 1920, 1920
      %25 = vsyncadd [#allocation5], %s24
      %s26 = sshll.u32 [#allocation4], 4
      %s27 = int_to_ptr.vmem [resolvable:$true] %s26
      %32 = dma.hbm_to_vmem [thread:$0]  %s1, 1920, %s27, [#allocation5], 128, 128, 8
    $region9: #{tpu_custom_call.1} parent=1 // pred_fallthru
      _
    // Predicated region
    $region10: #{tpu_custom_call.1} parent=1 // pred_check
      _
    $region11: #{tpu_custom_call.1} parent=1 // pred_check_branch
      %34 = sbr.rel (0) target = $region13
    $region12: #{tpu_custom_call.1} parent=1 // pred_region
      %35 = dma.done [#allocation3], 2048
    $region13: #{tpu_custom_call.1} parent=1 // pred_fallthru
      _
    // Predicated region
    $region14: #{tpu_custom_call.1} parent=1 // pred_check
      _
    $region15: #{tpu_custom_call.1} parent=1 // pred_check_branch
      %37 = sbr.rel (0) target = $region17
    $region16: #{tpu_custom_call.1} parent=1 // pred_region
      %38 = dma.done [#allocation5], 1920
    $region17: #{tpu_custom_call.1} parent=1 // pred_fallthru
      _
    %v39 = vld [vmem:[#allocation4 + $0x29] sm:$0x1]
    %v40 = vld [vmem:[#allocation4 + $0x2a] sm:$0x1]
    %v41 = vld [vmem:[#allocation2] sm:$0xff]
    %v42 = vld [vmem:[#allocation2 + $0x8] sm:$0xff]
    %v43 = vld [vmem:[#allocation2 + $0x18] sm:$0xff]
    %v44 = vld [vmem:[#allocation2 + $0x28] sm:$0xff]
    %v45 = vld [vmem:[#allocation2 + $0x38] sm:$0xff]
    %v46 = vld [vmem:[#allocation2 + $0x48] sm:$0xff]
    %v47 = vld [vmem:[#allocation2 + $0x58] sm:$0xff]
    %v48 = vld [vmem:[#allocation2 + $0x68] sm:$0xff]
    %v49 = vld [vmem:[#allocation2 + $0x78] sm:$0xff]
    %v50 = vld [vmem:[#allocation4 + $0x68] sm:$0xff]
    %v51 = vld [vmem:[#allocation4 + $0x70] sm:$0x1]
    %v52 = vlaneseq
    %v53 = vshrl.u32 %v52, 7
    %v54 = vsub.s32 0, %v53
    %v55 = vrot.slane %v50, %v54
    %v56 = vmul.f32 %v42, %v55
    %v57 = vlaneseq
    %v58 = vshrl.u32 %v57, 7
    %v59 = vsub.s32 0, %v58
    %v60 = vrot.slane %v51, %v59
    %v61 = vadd.f32 %v60, %v56
    %v62 = vlaneseq
    %v63 = vshrl.u32 %v62, 7
    %v64 = vsub.s32 1, %v63
    %v65 = vrot.slane %v50, %v64
    %v66 = vmul.f32 %v43, %v65
    %v67 = vadd.f32 %v61, %v66
    %v68 = vlaneseq
    %v69 = vshrl.u32 %v68, 7
    %v70 = vsub.s32 2, %v69
    %v71 = vrot.slane %v50, %v70
    %v72 = vmul.f32 %v44, %v71
    %v73 = vadd.f32 %v67, %v72
    %v74 = vlaneseq
    %v75 = vshrl.u32 %v74, 7
    %v76 = vsub.s32 3, %v75
    %v77 = vrot.slane %v50, %v76
    %v78 = vmul.f32 %v45, %v77
    %v79 = vadd.f32 %v73, %v78
    %v80 = vlaneseq
    %v81 = vshrl.u32 %v80, 7
    %v82 = vsub.s32 4, %v81
    %v83 = vrot.slane %v50, %v82
    %v84 = vmul.f32 %v46, %v83
    %v85 = vadd.f32 %v79, %v84
    %v86 = vlaneseq
    %v87 = vshrl.u32 %v86, 7
    %v88 = vsub.s32 5, %v87
    %v89 = vrot.slane %v50, %v88
    %v90 = vmul.f32 %v47, %v89
    %v91 = vadd.f32 %v85, %v90
    %v92 = vlaneseq
    %v93 = vshrl.u32 %v92, 7
    %v94 = vsub.s32 6, %v93
    %v95 = vrot.slane %v50, %v94
    %v96 = vmul.f32 %v48, %v95
    %v97 = vadd.f32 %v91, %v96
    %v98 = vlaneseq
    %v99 = vshrl.u32 %v98, 7
    %v100 = vsub.s32 7, %v99
    %v101 = vrot.slane %v50, %v100
    %v102 = vmul.f32 %v49, %v101
    %v103 = vadd.f32 %v97, %v102
    %vm104 = vcmask 64512
    %v105 = vsel %vm104, %v103, -inf
    %106 = vmax.xlane.f32.xlu0 %v105
    %v107 = vpop.xlane.xlu0 %106
    %v108 = vsub.f32 %v103, %v107
    %v109 = vmul.f32 %v108, 1.442695
    %v110 = vpow.pop %v109
    %v111 = vsel %vm104, %v110, 0.0
    %112 = vadd.xlane.f32.xlu0 %v111
    %v113 = vpop.xlane.xlu0 %112
    %v114 = vrcp.pop %v113
    %v115 = vmul.f32 %v110, %v114
    %v116 = vld [vmem:[#allocation4] sm:$0xff]
    %v117 = vld [vmem:[#allocation4 + $0x28] sm:$0x1]
    %v118 = vmul.f32 %v42, %v115
    %v119 = vmul.f32 %v43, %v115
    %v120 = vmul.f32 %v44, %v115
    %v121 = vmul.f32 %v45, %v115
    %v122 = vmul.f32 %v46, %v115
    %v123 = vmul.f32 %v47, %v115
    %v124 = vmul.f32 %v48, %v115
    %v125 = vmul.f32 %v49, %v115
    %v126 = vlaneseq
    %v127 = vshrl.u32 %v126, 7
    %v128 = vsub.s32 0, %v127
    %v129 = vrot.slane %v117, %v128
    %v131 = vsel %vm104, %v118, 0
    %v134 = vsel %vm104, %v119, 0
    %v137 = vsel %vm104, %v120, 0
    %v140 = vsel %vm104, %v121, 0
    %v143 = vsel %vm104, %v122, 0
    %v146 = vsel %vm104, %v123, 0
    %v149 = vsel %vm104, %v124, 0
    %v152 = vsel %vm104, %v125, 0
    %154 = vmatprep.subr.mxu0 0.0
    %155 = vmatpush1.msra.mxu0 %v116
    %156 = vmatprep.subr.mxu0 0.0
    %157 = vmatpush1.msra.mxu0 0.0
    %158 = vmatprep.subr.mxu0 0.0
    %159 = vmatpush1.msra.mxu0 0.0
    %160 = vmatprep.subr.mxu0 0.0
    %161 = vmatpush1.msra.mxu0 0.0
    %162 = vmatprep.subr.mxu0 0.0
    %163 = vmatpush1.msra.mxu0 0.0
    %164 = vmatprep.subr.mxu0 0.0
    %165 = vmatpush1.msra.mxu0 0.0
    %166 = vmatprep.subr.mxu0 0.0
    %167 = vmatpush1.msra.mxu0 0.0
    %168 = vmatprep.subr.mxu0 0.0
    %169 = vmatpush1.msra.mxu0 0.0
    %170 = vmatprep.subr.mxu0 0.0
    %171 = vmatpush1.msra.mxu0 0.0
    %172 = vmatprep.subr.mxu0 0.0
    %173 = vmatpush1.msra.mxu0 0.0
    %174 = vmatprep.subr.mxu0 0.0
    %175 = vmatpush1.msra.mxu0 0.0
    %176 = vmatprep.subr.mxu0 0.0
    %177 = vmatpush1.msra.mxu0 0.0
    %178 = vmatprep.subr.mxu0 0.0
    %179 = vmatpush1.msra.mxu0 0.0
    %180 = vmatprep.subr.mxu0 0.0
    %181 = vmatpush1.msra.mxu0 0.0
    %182 = vmatprep.subr.mxu0 0.0
    %183 = vmatpush1.msra.mxu0 0.0
    %184 = vmatprep.subr.mxu0 0.0
    %185 = vmatpush1.msra.mxu0 0.0
    %186 = vmatprep.subr.mxu0 0.0
    %187 = vmatpush1.msra.mxu0 0.0
    %188 = vmatprep.subr.mxu0 0.0
    %189 = vmatpush1.msra.mxu0 0.0
    %190 = vmatprep.subr.mxu0 0.0
    %191 = vmatpush1.msra.mxu0 0.0
    %192 = vmatprep.subr.mxu0 0.0
    %193 = vmatpush1.msra.mxu0 0.0
    %194 = vmatprep.subr.mxu0 0.0
    %195 = vmatpush1.msra.mxu0 0.0
    %196 = vmatprep.subr.mxu0 0.0
    %197 = vmatpush1.msra.mxu0 0.0
    %198 = vmatprep.subr.mxu0 0.0
    %199 = vmatpush1.msra.mxu0 0.0
    %200 = vmatprep.subr.mxu0 0.0
    %201 = vmatpush1.msra.mxu0 0.0
    %202 = vmatprep.subr.mxu0 0.0
    %203 = vmatpush1.msra.mxu0 0.0
    %204 = vmatprep.subr.mxu0 0.0
    %205 = vmatpush1.msra.mxu0 0.0
    %206 = vmatprep.subr.mxu0 0.0
    %207 = vmatpush1.msra.mxu0 0.0
    %208 = vmatprep.subr.mxu0 0.0
    %209 = vmatpush1.msra.mxu0 0.0
    %210 = vmatprep.subr.mxu0 0.0
    %211 = vmatpush1.msra.mxu0 0.0
    %212 = vmatprep.subr.mxu0 0.0
    %213 = vmatpush1.msra.mxu0 0.0
    %214 = vmatprep.subr.mxu0 0.0
    %215 = vmatpush1.msra.mxu0 0.0
    %216 = vmatprep.subr.mxu0 0.0
    %217 = vmatpush1.msra.mxu0 0.0
    %218 = vmatprep.mubr.f32.mxu0 0.0
    %219 = vmatmul.mubr.f32.gmra.mrb[0].mxu0 %v131
    %v220 = vpop.f32.mrb[0].mxu0
    %v221 = vadd.f32 %v129, %v220
    %v222 = vpop.f32.mrb[0].mxu0
    %223 = vmatprep.mubr.f32.mxu0 0.0
    %224 = vmatmul.mubr.f32.gmra.mrb[0].mxu0 %v134
    %v225 = vpop.f32.mrb[0].mxu0
    %v226 = vadd.f32 %v129, %v225
    %v227 = vpop.f32.mrb[0].mxu0
    %228 = vmatprep.mubr.f32.mxu0 0.0
    %229 = vmatmul.mubr.f32.gmra.mrb[0].mxu0 %v137
    %v230 = vpop.f32.mrb[0].mxu0
    %v231 = vadd.f32 %v129, %v230
    %v232 = vpop.f32.mrb[0].mxu0
    %233 = vmatprep.mubr.f32.mxu0 0.0
    %234 = vmatmul.mubr.f32.gmra.mrb[0].mxu0 %v140
    %v235 = vpop.f32.mrb[0].mxu0
    %v236 = vadd.f32 %v129, %v235
    %v237 = vpop.f32.mrb[0].mxu0
    %238 = vmatprep.mubr.f32.mxu0 0.0
    %239 = vmatmul.mubr.f32.gmra.mrb[0].mxu0 %v143
    %v240 = vpop.f32.mrb[0].mxu0
    %v241 = vadd.f32 %v129, %v240
    %v242 = vpop.f32.mrb[0].mxu0
    %243 = vmatprep.mubr.f32.mxu0 0.0
    %244 = vmatmul.mubr.f32.gmra.mrb[0].mxu0 %v146
    %v245 = vpop.f32.mrb[0].mxu0
    %v246 = vadd.f32 %v129, %v245
    %v247 = vpop.f32.mrb[0].mxu0
    %248 = vmatprep.mubr.f32.mxu0 0.0
    %249 = vmatmul.mubr.f32.gmra.mrb[0].mxu0 %v149
    %v250 = vpop.f32.mrb[0].mxu0
    %v251 = vadd.f32 %v129, %v250
    %v252 = vpop.f32.mrb[0].mxu0
    %253 = vmatprep.mubr.f32.mxu0 0.0
    %254 = vmatmul.mubr.f32.gmra.mrb[0].mxu0 %v152
    %v255 = vpop.f32.mrb[0].mxu0
    %v256 = vadd.f32 %v129, %v255
    %v257 = vpop.f32.mrb[0].mxu0
    %258 = vdwg.mxu0
    %v259 = vld [vmem:[#allocation4 + $0x66] sm:$0x1]
    %v260 = vld [vmem:[#allocation4 + $0x30] sm:$0x1]
    %v261 = vld [vmem:[#allocation4 + $0x58] sm:$0x1]
    %v262 = vlaneseq
    %v263 = vshrl.u32 %v262, 7
    %v264 = vsub.s32 0, %v263
    %v265 = vrot.slane %v259, %v264
    %267 = vrot.lane.b32.xlu0 %v265, 5
    %v268 = vpop.permute.xlu0 %267
    %v270 = vmul.f32 %v42, %v268
    %v271 = vmul.f32 %v43, %v268
    %v272 = vmul.f32 %v44, %v268
    %v273 = vmul.f32 %v45, %v268
    %v274 = vmul.f32 %v46, %v268
    %v275 = vmul.f32 %v47, %v268
    %v276 = vmul.f32 %v48, %v268
    %v277 = vmul.f32 %v49, %v268
    %279 = vset.pattern.permute.xlu0 8
    %280 = vperm.xlu0 %279, %v270
    %v281 = vpop.permute.xlu0 %280
    %284 = vset.pattern.permute.xlu0 8
    %285 = vperm.xlu0 %284, %v271
    %v286 = vpop.permute.xlu0 %285
    %289 = vset.pattern.permute.xlu0 8
    %290 = vperm.xlu0 %289, %v272
    %v291 = vpop.permute.xlu0 %290
    %294 = vset.pattern.permute.xlu0 8
    %295 = vperm.xlu0 %294, %v273
    %v296 = vpop.permute.xlu0 %295
    %299 = vset.pattern.permute.xlu0 8
    %300 = vperm.xlu0 %299, %v274
    %v301 = vpop.permute.xlu0 %300
    %304 = vset.pattern.permute.xlu0 8
    %305 = vperm.xlu0 %304, %v275
    %v306 = vpop.permute.xlu0 %305
    %309 = vset.pattern.permute.xlu0 8
    %310 = vperm.xlu0 %309, %v276
    %v311 = vpop.permute.xlu0 %310
    %314 = vset.pattern.permute.xlu0 8
    %315 = vperm.xlu0 %314, %v277
    %v316 = vpop.permute.xlu0 %315
    %v318 = vlaneseq
    %v319 = vshrl.u32 %v318, 7
    %v320 = vsub.s32 0, %v319
    %v321 = vrot.slane %v260, %v320
    %v322 = vmul.f32 %v281, %v321
    %v323 = vmul.f32 %v286, %v321
    %v324 = vmul.f32 %v291, %v321
    %v325 = vmul.f32 %v296, %v321
    %v326 = vmul.f32 %v301, %v321
    %v327 = vmul.f32 %v306, %v321
    %v328 = vmul.f32 %v311, %v321
    %v329 = vmul.f32 %v316, %v321
    %v330 = vlaneseq
    %v331 = vshrl.u32 %v330, 7
    %v332 = vsub.s32 0, %v331
    %v333 = vrot.slane %v261, %v332
    %v334 = vadd.f32 %v322, %v333
    %v335 = vadd.f32 %v323, %v333
    %v336 = vadd.f32 %v324, %v333
    %v337 = vadd.f32 %v325, %v333
    %v338 = vadd.f32 %v326, %v333
    %v339 = vadd.f32 %v327, %v333
    %v340 = vadd.f32 %v328, %v333
    %v341 = vadd.f32 %v329, %v333
    %v342 = vld [vmem:[#allocation4 + $0x8] sm:$0xff]
    %v343 = vld [vmem:[#allocation4 + $0x10] sm:$0xff]
    %v344 = vld [vmem:[#allocation4 + $0x18] sm:$0xff]
    %v345 = vld [vmem:[#allocation4 + $0x20] sm:$0xff]
    %vm346 = vcmask 261120
    %v348 = vsel %vm346, %v41, 0
    %350 = vmatprep.subr.mxu0 0.0
    %351 = vmatpush1.msra.mxu0 %v342
    %352 = vmatprep.subr.mxu0 0.0
    %353 = vmatpush1.msra.mxu0 %v343
    %354 = vmatprep.subr.mxu0 0.0
    %355 = vmatpush1.msra.mxu0 %v344
    %356 = vmatprep.subr.mxu0 0.0
    %357 = vmatpush1.msra.mxu0 %v345
    %358 = vmatprep.subr.mxu0 0.0
    %359 = vmatpush1.msra.mxu0 0.0
    %360 = vmatprep.subr.mxu0 0.0
    %361 = vmatpush1.msra.mxu0 0.0
    %362 = vmatprep.subr.mxu0 0.0
    %363 = vmatpush1.msra.mxu0 0.0
    %364 = vmatprep.subr.mxu0 0.0
    %365 = vmatpush1.msra.mxu0 0.0
    %366 = vmatprep.subr.mxu0 0.0
    %367 = vmatpush1.msra.mxu0 0.0
    %368 = vmatprep.subr.mxu0 0.0
    %369 = vmatpush1.msra.mxu0 0.0
    %370 = vmatprep.subr.mxu0 0.0
    %371 = vmatpush1.msra.mxu0 0.0
    %372 = vmatprep.subr.mxu0 0.0
    %373 = vmatpush1.msra.mxu0 0.0
    %374 = vmatprep.subr.mxu0 0.0
    %375 = vmatpush1.msra.mxu0 0.0
    %376 = vmatprep.subr.mxu0 0.0
    %377 = vmatpush1.msra.mxu0 0.0
    %378 = vmatprep.subr.mxu0 0.0
    %379 = vmatpush1.msra.mxu0 0.0
    %380 = vmatprep.subr.mxu0 0.0
    %381 = vmatpush1.msra.mxu0 0.0
    %382 = vmatprep.subr.mxu0 0.0
    %383 = vmatpush1.msra.mxu0 0.0
    %384 = vmatprep.subr.mxu0 0.0
    %385 = vmatpush1.msra.mxu0 0.0
    %386 = vmatprep.subr.mxu0 0.0
    %387 = vmatpush1.msra.mxu0 0.0
    %388 = vmatprep.subr.mxu0 0.0
    %389 = vmatpush1.msra.mxu0 0.0
    %390 = vmatprep.subr.mxu0 0.0
    %391 = vmatpush1.msra.mxu0 0.0
    %392 = vmatprep.subr.mxu0 0.0
    %393 = vmatpush1.msra.mxu0 0.0
    %394 = vmatprep.subr.mxu0 0.0
    %395 = vmatpush1.msra.mxu0 0.0
    %396 = vmatprep.subr.mxu0 0.0
    %397 = vmatpush1.msra.mxu0 0.0
    %398 = vmatprep.subr.mxu0 0.0
    %399 = vmatpush1.msra.mxu0 0.0
    %400 = vmatprep.subr.mxu0 0.0
    %401 = vmatpush1.msra.mxu0 0.0
    %402 = vmatprep.subr.mxu0 0.0
    %403 = vmatpush1.msra.mxu0 0.0
    %404 = vmatprep.subr.mxu0 0.0
    %405 = vmatpush1.msra.mxu0 0.0
    %406 = vmatprep.subr.mxu0 0.0
    %407 = vmatpush1.msra.mxu0 0.0
    %408 = vmatprep.subr.mxu0 0.0
    %409 = vmatpush1.msra.mxu0 0.0
    %410 = vmatprep.subr.mxu0 0.0
    %411 = vmatpush1.msra.mxu0 0.0
    %412 = vmatprep.subr.mxu0 0.0
    %413 = vmatpush1.msra.mxu0 0.0
    %414 = vmatprep.mubr.f32.mxu0 0.0
    %415 = vmatmul.mubr.f32.gmra.mrb[0].mxu0 %v348
    %v416 = vpop.f32.mrb[0].mxu0
    %v417 = vadd.f32 0.0, %v416
    %v418 = vpop.f32.mrb[0].mxu0
    %419 = vdwg.mxu0
    %v420 = vadd.f32 %v221, %v417
    %v421 = vlaneseq
    %v422 = vshrl.u32 %v421, 7
    %v423 = vsub.s32 0, %v422
    %v424 = vrot.slane %v39, %v423
    %v425 = vmul.f32 %v420, %v424
    %v426 = vtanh.pop %v425
    %v427 = vmul.f32 %v426, %v424
    %v428 = vlaneseq
    %v429 = vshrl.u32 %v428, 7
    %v430 = vsub.s32 0, %v429
    %v431 = vrot.slane %v40, %v430
    %v432 = vadd.f32 %v427, %v431
    %v433 = vmul.f32 %v432, %v41
    %435 = vrot.lane.b32.xlu0 %v432, 64
    %v436 = vpop.permute.xlu0 %435
    %v438 = vmul.f32 %v432, %v436
    %440 = vrot.lane.b32.xlu0 %v438, 32
    %v441 = vpop.permute.xlu0 %440
    %v443 = vadd.f32 %v433, %v441
    %v444 = vtanh.pop %v443
    %446 = vrot.lane.b32.xlu0 %v444, 64
    %v447 = vpop.permute.xlu0 %446
    %v449 = vmul.f32 %v432, %v447
    %451 = vrot.lane.b32.xlu0 %v449, 32
    %v452 = vpop.permute.xlu0 %451
    %v453 = vsel %vm346, %v452, 0
    %455 = vmatprep.subr.mxu0 0.0
    %456 = vmatpush1.msra.mxu0 %v342
    %457 = vmatprep.subr.mxu0 0.0
    %458 = vmatpush1.msra.mxu0 %v343
    %459 = vmatprep.subr.mxu0 0.0
    %460 = vmatpush1.msra.mxu0 %v344
    %461 = vmatprep.subr.mxu0 0.0
    %462 = vmatpush1.msra.mxu0 %v345
    %463 = vmatprep.subr.mxu0 0.0
    %464 = vmatpush1.msra.mxu0 0.0
    %465 = vmatprep.subr.mxu0 0.0
    %466 = vmatpush1.msra.mxu0 0.0
    %467 = vmatprep.subr.mxu0 0.0
    %468 = vmatpush1.msra.mxu0 0.0
    %469 = vmatprep.subr.mxu0 0.0
    %470 = vmatpush1.msra.mxu0 0.0
    %471 = vmatprep.subr.mxu0 0.0
    %472 = vmatpush1.msra.mxu0 0.0
    %473 = vmatprep.subr.mxu0 0.0
    %474 = vmatpush1.msra.mxu0 0.0
    %475 = vmatprep.subr.mxu0 0.0
    %476 = vmatpush1.msra.mxu0 0.0
    %477 = vmatprep.subr.mxu0 0.0
    %478 = vmatpush1.msra.mxu0 0.0
    %479 = vmatprep.subr.mxu0 0.0
    %480 = vmatpush1.msra.mxu0 0.0
    %481 = vmatprep.subr.mxu0 0.0
    %482 = vmatpush1.msra.mxu0 0.0
    %483 = vmatprep.subr.mxu0 0.0
    %484 = vmatpush1.msra.mxu0 0.0
    %485 = vmatprep.subr.mxu0 0.0
    %486 = vmatpush1.msra.mxu0 0.0
    %487 = vmatprep.subr.mxu0 0.0
    %488 = vmatpush1.msra.mxu0 0.0
    %489 = vmatprep.subr.mxu0 0.0
    %490 = vmatpush1.msra.mxu0 0.0
    %491 = vmatprep.subr.mxu0 0.0
    %492 = vmatpush1.msra.mxu0 0.0
    %493 = vmatprep.subr.mxu0 0.0
    %494 = vmatpush1.msra.mxu0 0.0
    %495 = vmatprep.subr.mxu0 0.0
    %496 = vmatpush1.msra.mxu0 0.0
    %497 = vmatprep.subr.mxu0 0.0
    %498 = vmatpush1.msra.mxu0 0.0
    %499 = vmatprep.subr.mxu0 0.0
    %500 = vmatpush1.msra.mxu0 0.0
    %501 = vmatprep.subr.mxu0 0.0
    %502 = vmatpush1.msra.mxu0 0.0
    %503 = vmatprep.subr.mxu0 0.0
    %504 = vmatpush1.msra.mxu0 0.0
    %505 = vmatprep.subr.mxu0 0.0
    %506 = vmatpush1.msra.mxu0 0.0
    %507 = vmatprep.subr.mxu0 0.0
    %508 = vmatpush1.msra.mxu0 0.0
    %509 = vmatprep.subr.mxu0 0.0
    %510 = vmatpush1.msra.mxu0 0.0
    %511 = vmatprep.subr.mxu0 0.0
    %512 = vmatpush1.msra.mxu0 0.0
    %513 = vmatprep.subr.mxu0 0.0
    %514 = vmatpush1.msra.mxu0 0.0
    %515 = vmatprep.subr.mxu0 0.0
    %516 = vmatpush1.msra.mxu0 0.0
    %517 = vmatprep.subr.mxu0 0.0
    %518 = vmatpush1.msra.mxu0 0.0
    %519 = vmatprep.mubr.f32.mxu0 0.0
    %520 = vmatmul.mubr.f32.gmra.mrb[0].mxu0 %v453
    %v521 = vpop.f32.mrb[0].mxu0
    %v522 = vadd.f32 0.0, %v521
    %v523 = vpop.f32.mrb[0].mxu0
    %524 = vdwg.mxu0
    %v525 = vadd.f32 %v226, %v522
    %v526 = vmul.f32 %v525, %v424
    %v527 = vtanh.pop %v526
    %v528 = vmul.f32 %v527, %v424
    %v529 = vadd.f32 %v528, %v431
    %v530 = vmul.f32 %v529, %v443
    %532 = vrot.lane.b32.xlu0 %v529, 64
    %v533 = vpop.permute.xlu0 %532
    %v535 = vmul.f32 %v529, %v533
    %537 = vrot.lane.b32.xlu0 %v535, 32
    %v538 = vpop.permute.xlu0 %537
    %v540 = vadd.f32 %v530, %v538
    %v541 = vtanh.pop %v540
    %543 = vrot.lane.b32.xlu0 %v541, 64
    %v544 = vpop.permute.xlu0 %543
    %v546 = vmul.f32 %v529, %v544
    %548 = vrot.lane.b32.xlu0 %v546, 32
    %v549 = vpop.permute.xlu0 %548
    %v550 = vsel %vm346, %v549, 0
    %552 = vmatprep.subr.mxu0 0.0
    %553 = vmatpush1.msra.mxu0 %v342
    %554 = vmatprep.subr.mxu0 0.0
    %555 = vmatpush1.msra.mxu0 %v343
    %556 = vmatprep.subr.mxu0 0.0
    %557 = vmatpush1.msra.mxu0 %v344
    %558 = vmatprep.subr.mxu0 0.0
    %559 = vmatpush1.msra.mxu0 %v345
    %560 = vmatprep.subr.mxu0 0.0
    %561 = vmatpush1.msra.mxu0 0.0
    %562 = vmatprep.subr.mxu0 0.0
    %563 = vmatpush1.msra.mxu0 0.0
    %564 = vmatprep.subr.mxu0 0.0
    %565 = vmatpush1.msra.mxu0 0.0
    %566 = vmatprep.subr.mxu0 0.0
    %567 = vmatpush1.msra.mxu0 0.0
    %568 = vmatprep.subr.mxu0 0.0
    %569 = vmatpush1.msra.mxu0 0.0
    %570 = vmatprep.subr.mxu0 0.0
    %571 = vmatpush1.msra.mxu0 0.0
    %572 = vmatprep.subr.mxu0 0.0
    %573 = vmatpush1.msra.mxu0 0.0
    %574 = vmatprep.subr.mxu0 0.0
    %575 = vmatpush1.msra.mxu0 0.0
    %576 = vmatprep.subr.mxu0 0.0
    %577 = vmatpush1.msra.mxu0 0.0
    %578 = vmatprep.subr.mxu0 0.0
    %579 = vmatpush1.msra.mxu0 0.0
    %580 = vmatprep.subr.mxu0 0.0
    %581 = vmatpush1.msra.mxu0 0.0
    %582 = vmatprep.subr.mxu0 0.0
    %583 = vmatpush1.msra.mxu0 0.0
    %584 = vmatprep.subr.mxu0 0.0
    %585 = vmatpush1.msra.mxu0 0.0
    %586 = vmatprep.subr.mxu0 0.0
    %587 = vmatpush1.msra.mxu0 0.0
    %588 = vmatprep.subr.mxu0 0.0
    %589 = vmatpush1.msra.mxu0 0.0
    %590 = vmatprep.subr.mxu0 0.0
    %591 = vmatpush1.msra.mxu0 0.0
    %592 = vmatprep.subr.mxu0 0.0
    %593 = vmatpush1.msra.mxu0 0.0
    %594 = vmatprep.subr.mxu0 0.0
    %595 = vmatpush1.msra.mxu0 0.0
    %596 = vmatprep.subr.mxu0 0.0
    %597 = vmatpush1.msra.mxu0 0.0
    %598 = vmatprep.subr.mxu0 0.0
    %599 = vmatpush1.msra.mxu0 0.0
    %600 = vmatprep.subr.mxu0 0.0
    %601 = vmatpush1.msra.mxu0 0.0
    %602 = vmatprep.subr.mxu0 0.0
    %603 = vmatpush1.msra.mxu0 0.0
    %604 = vmatprep.subr.mxu0 0.0
    %605 = vmatpush1.msra.mxu0 0.0
    %606 = vmatprep.subr.mxu0 0.0
    %607 = vmatpush1.msra.mxu0 0.0
    %608 = vmatprep.subr.mxu0 0.0
    %609 = vmatpush1.msra.mxu0 0.0
    %610 = vmatprep.subr.mxu0 0.0
    %611 = vmatpush1.msra.mxu0 0.0
    %612 = vmatprep.subr.mxu0 0.0
    %613 = vmatpush1.msra.mxu0 0.0
    %614 = vmatprep.subr.mxu0 0.0
    %615 = vmatpush1.msra.mxu0 0.0
    %616 = vmatprep.mubr.f32.mxu0 0.0
    %617 = vmatmul.mubr.f32.gmra.mrb[0].mxu0 %v550
    %v618 = vpop.f32.mrb[0].mxu0
    %v619 = vadd.f32 0.0, %v618
    %v620 = vpop.f32.mrb[0].mxu0
    %621 = vdwg.mxu0
    %v622 = vadd.f32 %v231, %v619
    %v623 = vmul.f32 %v622, %v424
    %v624 = vtanh.pop %v623
    %v625 = vmul.f32 %v624, %v424
    %v626 = vadd.f32 %v625, %v431
    %v627 = vmul.f32 %v626, %v540
    %629 = vrot.lane.b32.xlu0 %v626, 64
    %v630 = vpop.permute.xlu0 %629
    %v632 = vmul.f32 %v626, %v630
    %634 = vrot.lane.b32.xlu0 %v632, 32
    %v635 = vpop.permute.xlu0 %634
    %v637 = vadd.f32 %v627, %v635
    %v638 = vtanh.pop %v637
    %640 = vrot.lane.b32.xlu0 %v638, 64
    %v641 = vpop.permute.xlu0 %640
    %v643 = vmul.f32 %v626, %v641
    %645 = vrot.lane.b32.xlu0 %v643, 32
    %v646 = vpop.permute.xlu0 %645
    %v647 = vsel %vm346, %v646, 0
    %649 = vmatprep.subr.mxu0 0.0
    %650 = vmatpush1.msra.mxu0 %v342
    %651 = vmatprep.subr.mxu0 0.0
    %652 = vmatpush1.msra.mxu0 %v343
    %653 = vmatprep.subr.mxu0 0.0
    %654 = vmatpush1.msra.mxu0 %v344
    %655 = vmatprep.subr.mxu0 0.0
    %656 = vmatpush1.msra.mxu0 %v345
    %657 = vmatprep.subr.mxu0 0.0
    %658 = vmatpush1.msra.mxu0 0.0
    %659 = vmatprep.subr.mxu0 0.0
    %660 = vmatpush1.msra.mxu0 0.0
    %661 = vmatprep.subr.mxu0 0.0
    %662 = vmatpush1.msra.mxu0 0.0
    %663 = vmatprep.subr.mxu0 0.0
    %664 = vmatpush1.msra.mxu0 0.0
    %665 = vmatprep.subr.mxu0 0.0
    %666 = vmatpush1.msra.mxu0 0.0
    %667 = vmatprep.subr.mxu0 0.0
    %668 = vmatpush1.msra.mxu0 0.0
    %669 = vmatprep.subr.mxu0 0.0
    %670 = vmatpush1.msra.mxu0 0.0
    %671 = vmatprep.subr.mxu0 0.0
    %672 = vmatpush1.msra.mxu0 0.0
    %673 = vmatprep.subr.mxu0 0.0
    %674 = vmatpush1.msra.mxu0 0.0
    %675 = vmatprep.subr.mxu0 0.0
    %676 = vmatpush1.msra.mxu0 0.0
    %677 = vmatprep.subr.mxu0 0.0
    %678 = vmatpush1.msra.mxu0 0.0
    %679 = vmatprep.subr.mxu0 0.0
    %680 = vmatpush1.msra.mxu0 0.0
    %681 = vmatprep.subr.mxu0 0.0
    %682 = vmatpush1.msra.mxu0 0.0
    %683 = vmatprep.subr.mxu0 0.0
    %684 = vmatpush1.msra.mxu0 0.0
    %685 = vmatprep.subr.mxu0 0.0
    %686 = vmatpush1.msra.mxu0 0.0
    %687 = vmatprep.subr.mxu0 0.0
    %688 = vmatpush1.msra.mxu0 0.0
    %689 = vmatprep.subr.mxu0 0.0
    %690 = vmatpush1.msra.mxu0 0.0
    %691 = vmatprep.subr.mxu0 0.0
    %692 = vmatpush1.msra.mxu0 0.0
    %693 = vmatprep.subr.mxu0 0.0
    %694 = vmatpush1.msra.mxu0 0.0
    %695 = vmatprep.subr.mxu0 0.0
    %696 = vmatpush1.msra.mxu0 0.0
    %697 = vmatprep.subr.mxu0 0.0
    %698 = vmatpush1.msra.mxu0 0.0
    %699 = vmatprep.subr.mxu0 0.0
    %700 = vmatpush1.msra.mxu0 0.0
    %701 = vmatprep.subr.mxu0 0.0
    %702 = vmatpush1.msra.mxu0 0.0
    %703 = vmatprep.subr.mxu0 0.0
    %704 = vmatpush1.msra.mxu0 0.0
    %705 = vmatprep.subr.mxu0 0.0
    %706 = vmatpush1.msra.mxu0 0.0
    %707 = vmatprep.subr.mxu0 0.0
    %708 = vmatpush1.msra.mxu0 0.0
    %709 = vmatprep.subr.mxu0 0.0
    %710 = vmatpush1.msra.mxu0 0.0
    %711 = vmatprep.subr.mxu0 0.0
    %712 = vmatpush1.msra.mxu0 0.0
    %713 = vmatprep.mubr.f32.mxu0 0.0
    %714 = vmatmul.mubr.f32.gmra.mrb[0].mxu0 %v647
    %v715 = vpop.f32.mrb[0].mxu0
    %v716 = vadd.f32 0.0, %v715
    %v717 = vpop.f32.mrb[0].mxu0
    %718 = vdwg.mxu0
    %v719 = vadd.f32 %v236, %v716
    %v720 = vmul.f32 %v719, %v424
    %v721 = vtanh.pop %v720
    %v722 = vmul.f32 %v721, %v424
    %v723 = vadd.f32 %v722, %v431
    %v724 = vmul.f32 %v723, %v637
    %726 = vrot.lane.b32.xlu0 %v723, 64
    %v727 = vpop.permute.xlu0 %726
    %v729 = vmul.f32 %v723, %v727
    %731 = vrot.lane.b32.xlu0 %v729, 32
    %v732 = vpop.permute.xlu0 %731
    %v734 = vadd.f32 %v724, %v732
    %v735 = vtanh.pop %v734
    %737 = vrot.lane.b32.xlu0 %v735, 64
    %v738 = vpop.permute.xlu0 %737
    %v740 = vmul.f32 %v723, %v738
    %742 = vrot.lane.b32.xlu0 %v740, 32
    %v743 = vpop.permute.xlu0 %742
    %v744 = vsel %vm346, %v743, 0
    %746 = vmatprep.subr.mxu0 0.0
    %747 = vmatpush1.msra.mxu0 %v342
    %748 = vmatprep.subr.mxu0 0.0
    %749 = vmatpush1.msra.mxu0 %v343
    %750 = vmatprep.subr.mxu0 0.0
    %751 = vmatpush1.msra.mxu0 %v344
    %752 = vmatprep.subr.mxu0 0.0
    %753 = vmatpush1.msra.mxu0 %v345
    %754 = vmatprep.subr.mxu0 0.0
    %755 = vmatpush1.msra.mxu0 0.0
    %756 = vmatprep.subr.mxu0 0.0
    %757 = vmatpush1.msra.mxu0 0.0
    %758 = vmatprep.subr.mxu0 0.0
    %759 = vmatpush1.msra.mxu0 0.0
    %760 = vmatprep.subr.mxu0 0.0
    %761 = vmatpush1.msra.mxu0 0.0
    %762 = vmatprep.subr.mxu0 0.0
    %763 = vmatpush1.msra.mxu0 0.0
    %764 = vmatprep.subr.mxu0 0.0
    %765 = vmatpush1.msra.mxu0 0.0
    %766 = vmatprep.subr.mxu0 0.0
    %767 = vmatpush1.msra.mxu0 0.0
    %768 = vmatprep.subr.mxu0 0.0
    %769 = vmatpush1.msra.mxu0 0.0
    %770 = vmatprep.subr.mxu0 0.0
    %771 = vmatpush1.msra.mxu0 0.0
    %772 = vmatprep.subr.mxu0 0.0
    %773 = vmatpush1.msra.mxu0 0.0
    %774 = vmatprep.subr.mxu0 0.0
    %775 = vmatpush1.msra.mxu0 0.0
    %776 = vmatprep.subr.mxu0 0.0
    %777 = vmatpush1.msra.mxu0 0.0
    %778 = vmatprep.subr.mxu0 0.0
    %779 = vmatpush1.msra.mxu0 0.0
    %780 = vmatprep.subr.mxu0 0.0
    %781 = vmatpush1.msra.mxu0 0.0
    %782 = vmatprep.subr.mxu0 0.0
    %783 = vmatpush1.msra.mxu0 0.0
    %784 = vmatprep.subr.mxu0 0.0
    %785 = vmatpush1.msra.mxu0 0.0
    %786 = vmatprep.subr.mxu0 0.0
    %787 = vmatpush1.msra.mxu0 0.0
    %788 = vmatprep.subr.mxu0 0.0
    %789 = vmatpush1.msra.mxu0 0.0
    %790 = vmatprep.subr.mxu0 0.0
    %791 = vmatpush1.msra.mxu0 0.0
    %792 = vmatprep.subr.mxu0 0.0
    %793 = vmatpush1.msra.mxu0 0.0
    %794 = vmatprep.subr.mxu0 0.0
    %795 = vmatpush1.msra.mxu0 0.0
    %796 = vmatprep.subr.mxu0 0.0
    %797 = vmatpush1.msra.mxu0 0.0
    %798 = vmatprep.subr.mxu0 0.0
    %799 = vmatpush1.msra.mxu0 0.0
    %800 = vmatprep.subr.mxu0 0.0
    %801 = vmatpush1.msra.mxu0 0.0
    %802 = vmatprep.subr.mxu0 0.0
    %803 = vmatpush1.msra.mxu0 0.0
    %804 = vmatprep.subr.mxu0 0.0
    %805 = vmatpush1.msra.mxu0 0.0
    %806 = vmatprep.subr.mxu0 0.0
    %807 = vmatpush1.msra.mxu0 0.0
    %808 = vmatprep.subr.mxu0 0.0
    %809 = vmatpush1.msra.mxu0 0.0
    %810 = vmatprep.mubr.f32.mxu0 0.0
    %811 = vmatmul.mubr.f32.gmra.mrb[0].mxu0 %v744
    %v812 = vpop.f32.mrb[0].mxu0
    %v813 = vadd.f32 0.0, %v812
    %v814 = vpop.f32.mrb[0].mxu0
    %815 = vdwg.mxu0
    %v816 = vadd.f32 %v241, %v813
    %v817 = vmul.f32 %v816, %v424
    %v818 = vtanh.pop %v817
    %v819 = vmul.f32 %v818, %v424
    %v820 = vadd.f32 %v819, %v431
    %v821 = vmul.f32 %v820, %v734
    %823 = vrot.lane.b32.xlu0 %v820, 64
    %v824 = vpop.permute.xlu0 %823
    %v826 = vmul.f32 %v820, %v824
    %828 = vrot.lane.b32.xlu0 %v826, 32
    %v829 = vpop.permute.xlu0 %828
    %v831 = vadd.f32 %v821, %v829
    %v832 = vtanh.pop %v831
    %834 = vrot.lane.b32.xlu0 %v832, 64
    %v835 = vpop.permute.xlu0 %834
    %v837 = vmul.f32 %v820, %v835
    %839 = vrot.lane.b32.xlu0 %v837, 32
    %v840 = vpop.permute.xlu0 %839
    %v841 = vsel %vm346, %v840, 0
    %843 = vmatprep.subr.mxu0 0.0
    %844 = vmatpush1.msra.mxu0 %v342
    %845 = vmatprep.subr.mxu0 0.0
    %846 = vmatpush1.msra.mxu0 %v343
    %847 = vmatprep.subr.mxu0 0.0
    %848 = vmatpush1.msra.mxu0 %v344
    %849 = vmatprep.subr.mxu0 0.0
    %850 = vmatpush1.msra.mxu0 %v345
    %851 = vmatprep.subr.mxu0 0.0
    %852 = vmatpush1.msra.mxu0 0.0
    %853 = vmatprep.subr.mxu0 0.0
    %854 = vmatpush1.msra.mxu0 0.0
    %855 = vmatprep.subr.mxu0 0.0
    %856 = vmatpush1.msra.mxu0 0.0
    %857 = vmatprep.subr.mxu0 0.0
    %858 = vmatpush1.msra.mxu0 0.0
    %859 = vmatprep.subr.mxu0 0.0
    %860 = vmatpush1.msra.mxu0 0.0
    %861 = vmatprep.subr.mxu0 0.0
    %862 = vmatpush1.msra.mxu0 0.0
    %863 = vmatprep.subr.mxu0 0.0
    %864 = vmatpush1.msra.mxu0 0.0
    %865 = vmatprep.subr.mxu0 0.0
    %866 = vmatpush1.msra.mxu0 0.0
    %867 = vmatprep.subr.mxu0 0.0
    %868 = vmatpush1.msra.mxu0 0.0
    %869 = vmatprep.subr.mxu0 0.0
    %870 = vmatpush1.msra.mxu0 0.0
    %871 = vmatprep.subr.mxu0 0.0
    %872 = vmatpush1.msra.mxu0 0.0
    %873 = vmatprep.subr.mxu0 0.0
    %874 = vmatpush1.msra.mxu0 0.0
    %875 = vmatprep.subr.mxu0 0.0
    %876 = vmatpush1.msra.mxu0 0.0
    %877 = vmatprep.subr.mxu0 0.0
    %878 = vmatpush1.msra.mxu0 0.0
    %879 = vmatprep.subr.mxu0 0.0
    %880 = vmatpush1.msra.mxu0 0.0
    %881 = vmatprep.subr.mxu0 0.0
    %882 = vmatpush1.msra.mxu0 0.0
    %883 = vmatprep.subr.mxu0 0.0
    %884 = vmatpush1.msra.mxu0 0.0
    %885 = vmatprep.subr.mxu0 0.0
    %886 = vmatpush1.msra.mxu0 0.0
    %887 = vmatprep.subr.mxu0 0.0
    %888 = vmatpush1.msra.mxu0 0.0
    %889 = vmatprep.subr.mxu0 0.0
    %890 = vmatpush1.msra.mxu0 0.0
    %891 = vmatprep.subr.mxu0 0.0
    %892 = vmatpush1.msra.mxu0 0.0
    %893 = vmatprep.subr.mxu0 0.0
    %894 = vmatpush1.msra.mxu0 0.0
    %895 = vmatprep.subr.mxu0 0.0
    %896 = vmatpush1.msra.mxu0 0.0
    %897 = vmatprep.subr.mxu0 0.0
    %898 = vmatpush1.msra.mxu0 0.0
    %899 = vmatprep.subr.mxu0 0.0
    %900 = vmatpush1.msra.mxu0 0.0
    %901 = vmatprep.subr.mxu0 0.0
    %902 = vmatpush1.msra.mxu0 0.0
    %903 = vmatprep.subr.mxu0 0.0
    %904 = vmatpush1.msra.mxu0 0.0
    %905 = vmatprep.subr.mxu0 0.0
    %906 = vmatpush1.msra.mxu0 0.0
    %907 = vmatprep.mubr.f32.mxu0 0.0
    %908 = vmatmul.mubr.f32.gmra.mrb[0].mxu0 %v841
    %v909 = vpop.f32.mrb[0].mxu0
    %v910 = vadd.f32 0.0, %v909
    %v911 = vpop.f32.mrb[0].mxu0
    %912 = vdwg.mxu0
    %v913 = vadd.f32 %v246, %v910
    %v914 = vmul.f32 %v913, %v424
    %v915 = vtanh.pop %v914
    %v916 = vmul.f32 %v915, %v424
    %v917 = vadd.f32 %v916, %v431
    %v918 = vmul.f32 %v917, %v831
    %920 = vrot.lane.b32.xlu0 %v917, 64
    %v921 = vpop.permute.xlu0 %920
    %v923 = vmul.f32 %v917, %v921
    %925 = vrot.lane.b32.xlu0 %v923, 32
    %v926 = vpop.permute.xlu0 %925
    %v928 = vadd.f32 %v918, %v926
    %v929 = vtanh.pop %v928
    %931 = vrot.lane.b32.xlu0 %v929, 64
    %v932 = vpop.permute.xlu0 %931
    %v934 = vmul.f32 %v917, %v932
    %936 = vrot.lane.b32.xlu0 %v934, 32
    %v937 = vpop.permute.xlu0 %936
    %v938 = vsel %vm346, %v937, 0
    %940 = vmatprep.subr.mxu0 0.0
    %941 = vmatpush1.msra.mxu0 %v342
    %942 = vmatprep.subr.mxu0 0.0
    %943 = vmatpush1.msra.mxu0 %v343
    %944 = vmatprep.subr.mxu0 0.0
    %945 = vmatpush1.msra.mxu0 %v344
    %946 = vmatprep.subr.mxu0 0.0
    %947 = vmatpush1.msra.mxu0 %v345
    %948 = vmatprep.subr.mxu0 0.0
    %949 = vmatpush1.msra.mxu0 0.0
    %950 = vmatprep.subr.mxu0 0.0
    %951 = vmatpush1.msra.mxu0 0.0
    %952 = vmatprep.subr.mxu0 0.0
    %953 = vmatpush1.msra.mxu0 0.0
    %954 = vmatprep.subr.mxu0 0.0
    %955 = vmatpush1.msra.mxu0 0.0
    %956 = vmatprep.subr.mxu0 0.0
    %957 = vmatpush1.msra.mxu0 0.0
    %958 = vmatprep.subr.mxu0 0.0
    %959 = vmatpush1.msra.mxu0 0.0
    %960 = vmatprep.subr.mxu0 0.0
    %961 = vmatpush1.msra.mxu0 0.0
    %962 = vmatprep.subr.mxu0 0.0
    %963 = vmatpush1.msra.mxu0 0.0
    %964 = vmatprep.subr.mxu0 0.0
    %965 = vmatpush1.msra.mxu0 0.0
    %966 = vmatprep.subr.mxu0 0.0
    %967 = vmatpush1.msra.mxu0 0.0
    %968 = vmatprep.subr.mxu0 0.0
    %969 = vmatpush1.msra.mxu0 0.0
    %970 = vmatprep.subr.mxu0 0.0
    %971 = vmatpush1.msra.mxu0 0.0
    %972 = vmatprep.subr.mxu0 0.0
    %973 = vmatpush1.msra.mxu0 0.0
    %974 = vmatprep.subr.mxu0 0.0
    %975 = vmatpush1.msra.mxu0 0.0
    %976 = vmatprep.subr.mxu0 0.0
    %977 = vmatpush1.msra.mxu0 0.0
    %978 = vmatprep.subr.mxu0 0.0
    %979 = vmatpush1.msra.mxu0 0.0
    %980 = vmatprep.subr.mxu0 0.0
    %981 = vmatpush1.msra.mxu0 0.0
    %982 = vmatprep.subr.mxu0 0.0
    %983 = vmatpush1.msra.mxu0 0.0
    %984 = vmatprep.subr.mxu0 0.0
    %985 = vmatpush1.msra.mxu0 0.0
    %986 = vmatprep.subr.mxu0 0.0
    %987 = vmatpush1.msra.mxu0 0.0
    %988 = vmatprep.subr.mxu0 0.0
    %989 = vmatpush1.msra.mxu0 0.0
    %990 = vmatprep.subr.mxu0 0.0
    %991 = vmatpush1.msra.mxu0 0.0
    %992 = vmatprep.subr.mxu0 0.0
    %993 = vmatpush1.msra.mxu0 0.0
    %994 = vmatprep.subr.mxu0 0.0
    %995 = vmatpush1.msra.mxu0 0.0
    %996 = vmatprep.subr.mxu0 0.0
    %997 = vmatpush1.msra.mxu0 0.0
    %998 = vmatprep.subr.mxu0 0.0
    %999 = vmatpush1.msra.mxu0 0.0
    %1000 = vmatprep.subr.mxu0 0.0
    %1001 = vmatpush1.msra.mxu0 0.0
    %1002 = vmatprep.subr.mxu0 0.0
    %1003 = vmatpush1.msra.mxu0 0.0
    %1004 = vmatprep.mubr.f32.mxu0 0.0
    %1005 = vmatmul.mubr.f32.gmra.mrb[0].mxu0 %v938
    %v1006 = vpop.f32.mrb[0].mxu0
    %v1007 = vadd.f32 0.0, %v1006
    %v1008 = vpop.f32.mrb[0].mxu0
    %1009 = vdwg.mxu0
    %v1010 = vadd.f32 %v251, %v1007
    %v1011 = vmul.f32 %v1010, %v424
    %v1012 = vtanh.pop %v1011
    %v1013 = vmul.f32 %v1012, %v424
    %v1014 = vadd.f32 %v1013, %v431
    %v1015 = vmul.f32 %v1014, %v928
    %1017 = vrot.lane.b32.xlu0 %v1014, 64
    %v1018 = vpop.permute.xlu0 %1017
    %v1020 = vmul.f32 %v1014, %v1018
    %1022 = vrot.lane.b32.xlu0 %v1020, 32
    %v1023 = vpop.permute.xlu0 %1022
    %v1025 = vadd.f32 %v1015, %v1023
    %v1026 = vtanh.pop %v1025
    %1028 = vrot.lane.b32.xlu0 %v1026, 64
    %v1029 = vpop.permute.xlu0 %1028
    %v1031 = vmul.f32 %v1014, %v1029
    %1033 = vrot.lane.b32.xlu0 %v1031, 32
    %v1034 = vpop.permute.xlu0 %1033
    %v1035 = vsel %vm346, %v1034, 0
    %1037 = vmatprep.subr.mxu0 0.0
    %1038 = vmatpush1.msra.mxu0 %v342
    %1039 = vmatprep.subr.mxu0 0.0
    %1040 = vmatpush1.msra.mxu0 %v343
    %1041 = vmatprep.subr.mxu0 0.0
    %1042 = vmatpush1.msra.mxu0 %v344
    %1043 = vmatprep.subr.mxu0 0.0
    %1044 = vmatpush1.msra.mxu0 %v345
    %1045 = vmatprep.subr.mxu0 0.0
    %1046 = vmatpush1.msra.mxu0 0.0
    %1047 = vmatprep.subr.mxu0 0.0
    %1048 = vmatpush1.msra.mxu0 0.0
    %1049 = vmatprep.subr.mxu0 0.0
    %1050 = vmatpush1.msra.mxu0 0.0
    %1051 = vmatprep.subr.mxu0 0.0
    %1052 = vmatpush1.msra.mxu0 0.0
    %1053 = vmatprep.subr.mxu0 0.0
    %1054 = vmatpush1.msra.mxu0 0.0
    %1055 = vmatprep.subr.mxu0 0.0
    %1056 = vmatpush1.msra.mxu0 0.0
    %1057 = vmatprep.subr.mxu0 0.0
    %1058 = vmatpush1.msra.mxu0 0.0
    %1059 = vmatprep.subr.mxu0 0.0
    %1060 = vmatpush1.msra.mxu0 0.0
    %1061 = vmatprep.subr.mxu0 0.0
    %1062 = vmatpush1.msra.mxu0 0.0
    %1063 = vmatprep.subr.mxu0 0.0
    %1064 = vmatpush1.msra.mxu0 0.0
    %1065 = vmatprep.subr.mxu0 0.0
    %1066 = vmatpush1.msra.mxu0 0.0
    %1067 = vmatprep.subr.mxu0 0.0
    %1068 = vmatpush1.msra.mxu0 0.0
    %1069 = vmatprep.subr.mxu0 0.0
    %1070 = vmatpush1.msra.mxu0 0.0
    %1071 = vmatprep.subr.mxu0 0.0
    %1072 = vmatpush1.msra.mxu0 0.0
    %1073 = vmatprep.subr.mxu0 0.0
    %1074 = vmatpush1.msra.mxu0 0.0
    %1075 = vmatprep.subr.mxu0 0.0
    %1076 = vmatpush1.msra.mxu0 0.0
    %1077 = vmatprep.subr.mxu0 0.0
    %1078 = vmatpush1.msra.mxu0 0.0
    %1079 = vmatprep.subr.mxu0 0.0
    %1080 = vmatpush1.msra.mxu0 0.0
    %1081 = vmatprep.subr.mxu0 0.0
    %1082 = vmatpush1.msra.mxu0 0.0
    %1083 = vmatprep.subr.mxu0 0.0
    %1084 = vmatpush1.msra.mxu0 0.0
    %1085 = vmatprep.subr.mxu0 0.0
    %1086 = vmatpush1.msra.mxu0 0.0
    %1087 = vmatprep.subr.mxu0 0.0
    %1088 = vmatpush1.msra.mxu0 0.0
    %1089 = vmatprep.subr.mxu0 0.0
    %1090 = vmatpush1.msra.mxu0 0.0
    %1091 = vmatprep.subr.mxu0 0.0
    %1092 = vmatpush1.msra.mxu0 0.0
    %1093 = vmatprep.subr.mxu0 0.0
    %1094 = vmatpush1.msra.mxu0 0.0
    %1095 = vmatprep.subr.mxu0 0.0
    %1096 = vmatpush1.msra.mxu0 0.0
    %1097 = vmatprep.subr.mxu0 0.0
    %1098 = vmatpush1.msra.mxu0 0.0
    %1099 = vmatprep.subr.mxu0 0.0
    %1100 = vmatpush1.msra.mxu0 0.0
    %1101 = vmatprep.mubr.f32.mxu0 0.0
    %1102 = vmatmul.mubr.f32.gmra.mrb[0].mxu0 %v1035
    %v1103 = vpop.f32.mrb[0].mxu0
    %v1104 = vadd.f32 0.0, %v1103
    %v1105 = vpop.f32.mrb[0].mxu0
    %1106 = vdwg.mxu0
    %v1107 = vadd.f32 %v256, %v1104
    %v1108 = vmul.f32 %v1107, %v424
    %v1109 = vtanh.pop %v1108
    %v1110 = vmul.f32 %v1109, %v424
    %v1111 = vadd.f32 %v1110, %v431
    %v1112 = vmul.f32 %v1111, %v1025
    %1114 = vrot.lane.b32.xlu0 %v1111, 64
    %v1115 = vpop.permute.xlu0 %1114
    %v1117 = vmul.f32 %v1111, %v1115
    %1119 = vrot.lane.b32.xlu0 %v1117, 32
    %v1120 = vpop.permute.xlu0 %1119
    %v1122 = vadd.f32 %v1112, %v1120
    %v1123 = vtanh.pop %v1122
    %1125 = vrot.lane.b32.xlu0 %v1123, 64
    %v1126 = vpop.permute.xlu0 %1125
    %v1128 = vmul.f32 %v1111, %v1126
    %v1129 = vld [vmem:[#allocation4 + $0x60] sm:$0x1]
    %v1130 = vlaneseq
    %v1131 = vshrl.u32 %v1130, 7
    %v1132 = vsub.s32 0, %v1131
    %v1133 = vrot.slane %v1129, %v1132
    %1135 = vrot.lane.b32.xlu0 %v1133, 96
    %v1136 = vpop.permute.xlu0 %1135
    %v1138 = vmul.f32 %v1128, %v1136
    %1140 = vrot.lane.b32.xlu0 %v1138, 32
    %v1141 = vpop.permute.xlu0 %1140
    %v1143 = vsel %vm346, %v1141, 0.0
    %1144 = vadd.xlane.f32.xlu0 %v1143
    %v1145 = vpop.xlane.xlu0 %1144
    %v1146 = vadd.f32 %v1145, %v265
    %v1147 = vld [vmem:[#allocation4 + $0x61] sm:$0x1]
    %v1148 = vld [vmem:[#allocation4 + $0x62] sm:$0x1]
    %v1149 = vld [vmem:[#allocation4 + $0x63] sm:$0x1]
    %1151 = vset.pattern.permute.xlu0 0
    %1152 = vperm.xlu0 %1151, %v1146
    %v1153 = vpop.permute.xlu0 %1152
    %v1155 = vlaneseq
    %v1156 = vshrl.u32 %v1155, 7
    %v1157 = vsub.s32 0, %v1156
    %v1158 = vrot.slane %v1147, %v1157
    %v1159 = vmul.f32 %v1153, %v1158
    %v1160 = vlaneseq
    %v1161 = vshrl.u32 %v1160, 7
    %v1162 = vsub.s32 0, %v1161
    %v1163 = vrot.slane %v1148, %v1162
    %v1164 = vadd.f32 %v1159, %v1163
    %v1165 = vlaneseq
    %v1166 = vshrl.u32 %v1165, 7
    %v1167 = vsub.s32 0, %v1166
    %v1168 = vrot.slane %v1149, %v1167
    %v1169 = vmul.f32 %v1164, %v1168
    %v1170 = vsel %vm346, %v1169, 0.0
    %1171 = vadd.xlane.f32.xlu0 %v1170
    %v1172 = vpop.xlane.xlu0 %1171
    %v1173 = vadd.f32 %v1172, %v265
    %1175 = vset.pattern.permute.xlu0 1
    %1176 = vperm.xlu0 %1175, %v1173
    %v1177 = vpop.permute.xlu0 %1176
    %v1179 = vmul.f32 %v1177, %v321
    %v1180 = vld [vmem:[#allocation4 + $0x38] sm:$0xff]
    %v1181 = vld [vmem:[#allocation4 + $0x40] sm:$0xff]
    %v1182 = vld [vmem:[#allocation4 + $0x48] sm:$0xff]
    %v1183 = vld [vmem:[#allocation4 + $0x50] sm:$0xff]
    %v1184 = vadd.f32 %v334, %v1179
    %1185 = vrot.lane.b32.xlu0 %v41, 64
    %v1186 = vpop.permute.xlu0 %1185
    %v1187 = vsel %vm346, %v1186, 0
    %1189 = vmatprep.subr.mxu0 0.0
    %1190 = vmatpush1.msra.mxu0 %v1180
    %1191 = vmatprep.subr.mxu0 0.0
    %1192 = vmatpush1.msra.mxu0 %v1181
    %1193 = vmatprep.subr.mxu0 0.0
    %1194 = vmatpush1.msra.mxu0 %v1182
    %1195 = vmatprep.subr.mxu0 0.0
    %1196 = vmatpush1.msra.mxu0 %v1183
    %1197 = vmatprep.subr.mxu0 0.0
    %1198 = vmatpush1.msra.mxu0 0.0
    %1199 = vmatprep.subr.mxu0 0.0
    %1200 = vmatpush1.msra.mxu0 0.0
    %1201 = vmatprep.subr.mxu0 0.0
    %1202 = vmatpush1.msra.mxu0 0.0
    %1203 = vmatprep.subr.mxu0 0.0
    %1204 = vmatpush1.msra.mxu0 0.0
    %1205 = vmatprep.subr.mxu0 0.0
    %1206 = vmatpush1.msra.mxu0 0.0
    %1207 = vmatprep.subr.mxu0 0.0
    %1208 = vmatpush1.msra.mxu0 0.0
    %1209 = vmatprep.subr.mxu0 0.0
    %1210 = vmatpush1.msra.mxu0 0.0
    %1211 = vmatprep.subr.mxu0 0.0
    %1212 = vmatpush1.msra.mxu0 0.0
    %1213 = vmatprep.subr.mxu0 0.0
    %1214 = vmatpush1.msra.mxu0 0.0
    %1215 = vmatprep.subr.mxu0 0.0
    %1216 = vmatpush1.msra.mxu0 0.0
    %1217 = vmatprep.subr.mxu0 0.0
    %1218 = vmatpush1.msra.mxu0 0.0
    %1219 = vmatprep.subr.mxu0 0.0
    %1220 = vmatpush1.msra.mxu0 0.0
    %1221 = vmatprep.subr.mxu0 0.0
    %1222 = vmatpush1.msra.mxu0 0.0
    %1223 = vmatprep.subr.mxu0 0.0
    %1224 = vmatpush1.msra.mxu0 0.0
    %1225 = vmatprep.subr.mxu0 0.0
    %1226 = vmatpush1.msra.mxu0 0.0
    %1227 = vmatprep.subr.mxu0 0.0
    %1228 = vmatpush1.msra.mxu0 0.0
    %1229 = vmatprep.subr.mxu0 0.0
    %1230 = vmatpush1.msra.mxu0 0.0
    %1231 = vmatprep.subr.mxu0 0.0
    %1232 = vmatpush1.msra.mxu0 0.0
    %1233 = vmatprep.subr.mxu0 0.0
    %1234 = vmatpush1.msra.mxu0 0.0
    %1235 = vmatprep.subr.mxu0 0.0
    %1236 = vmatpush1.msra.mxu0 0.0
    %1237 = vmatprep.subr.mxu0 0.0
    %1238 = vmatpush1.msra.mxu0 0.0
    %1239 = vmatprep.subr.mxu0 0.0
    %1240 = vmatpush1.msra.mxu0 0.0
    %1241 = vmatprep.subr.mxu0 0.0
    %1242 = vmatpush1.msra.mxu0 0.0
    %1243 = vmatprep.subr.mxu0 0.0
    %1244 = vmatpush1.msra.mxu0 0.0
    %1245 = vmatprep.subr.mxu0 0.0
    %1246 = vmatpush1.msra.mxu0 0.0
    %1247 = vmatprep.subr.mxu0 0.0
    %1248 = vmatpush1.msra.mxu0 0.0
    %1249 = vmatprep.subr.mxu0 0.0
    %1250 = vmatpush1.msra.mxu0 0.0
    %1251 = vmatprep.subr.mxu0 0.0
    %1252 = vmatpush1.msra.mxu0 0.0
    %1253 = vmatprep.mubr.f32.mxu0 0.0
    %1254 = vmatmul.mubr.f32.gmra.mrb[0].mxu0 %v1187
    %v1255 = vpop.f32.mrb[0].mxu0
    %v1256 = vadd.f32 0.0, %v1255
    %v1257 = vpop.f32.mrb[0].mxu0
    %1258 = vdwg.mxu0
    %v1259 = vadd.f32 %v1184, %v1256
    %v1260 = vmul.f32 %v1259, %v424
    %v1261 = vtanh.pop %v1260
    %v1262 = vmul.f32 %v1261, %v424
    %v1263 = vadd.f32 %v1262, %v431
    %v1265 = vmul.f32 %v1263, %v1186
    %1267 = vrot.lane.b32.xlu0 %v1263, 64
    %v1268 = vpop.permute.xlu0 %1267
    %v1270 = vmul.f32 %v1263, %v1268
    %1272 = vrot.lane.b32.xlu0 %v1270, 32
    %v1273 = vpop.permute.xlu0 %1272
    %v1275 = vadd.f32 %v1265, %v1273
    %v1276 = vtanh.pop %v1275
    %1278 = vrot.lane.b32.xlu0 %v1276, 64
    %v1279 = vpop.permute.xlu0 %1278
    %v1281 = vmul.f32 %v1263, %v1279
    %v1282 = vadd.f32 %v335, %v1179
    %1284 = vrot.lane.b32.xlu0 %v1281, 32
    %v1285 = vpop.permute.xlu0 %1284
    %v1286 = vsel %vm346, %v1285, 0
    %1288 = vmatprep.subr.mxu0 0.0
    %1289 = vmatpush1.msra.mxu0 %v1180
    %1290 = vmatprep.subr.mxu0 0.0
    %1291 = vmatpush1.msra.mxu0 %v1181
    %1292 = vmatprep.subr.mxu0 0.0
    %1293 = vmatpush1.msra.mxu0 %v1182
    %1294 = vmatprep.subr.mxu0 0.0
    %1295 = vmatpush1.msra.mxu0 %v1183
    %1296 = vmatprep.subr.mxu0 0.0
    %1297 = vmatpush1.msra.mxu0 0.0
    %1298 = vmatprep.subr.mxu0 0.0
    %1299 = vmatpush1.msra.mxu0 0.0
    %1300 = vmatprep.subr.mxu0 0.0
    %1301 = vmatpush1.msra.mxu0 0.0
    %1302 = vmatprep.subr.mxu0 0.0
    %1303 = vmatpush1.msra.mxu0 0.0
    %1304 = vmatprep.subr.mxu0 0.0
    %1305 = vmatpush1.msra.mxu0 0.0
    %1306 = vmatprep.subr.mxu0 0.0
    %1307 = vmatpush1.msra.mxu0 0.0
    %1308 = vmatprep.subr.mxu0 0.0
    %1309 = vmatpush1.msra.mxu0 0.0
    %1310 = vmatprep.subr.mxu0 0.0
    %1311 = vmatpush1.msra.mxu0 0.0
    %1312 = vmatprep.subr.mxu0 0.0
    %1313 = vmatpush1.msra.mxu0 0.0
    %1314 = vmatprep.subr.mxu0 0.0
    %1315 = vmatpush1.msra.mxu0 0.0
    %1316 = vmatprep.subr.mxu0 0.0
    %1317 = vmatpush1.msra.mxu0 0.0
    %1318 = vmatprep.subr.mxu0 0.0
    %1319 = vmatpush1.msra.mxu0 0.0
    %1320 = vmatprep.subr.mxu0 0.0
    %1321 = vmatpush1.msra.mxu0 0.0
    %1322 = vmatprep.subr.mxu0 0.0
    %1323 = vmatpush1.msra.mxu0 0.0
    %1324 = vmatprep.subr.mxu0 0.0
    %1325 = vmatpush1.msra.mxu0 0.0
    %1326 = vmatprep.subr.mxu0 0.0
    %1327 = vmatpush1.msra.mxu0 0.0
    %1328 = vmatprep.subr.mxu0 0.0
    %1329 = vmatpush1.msra.mxu0 0.0
    %1330 = vmatprep.subr.mxu0 0.0
    %1331 = vmatpush1.msra.mxu0 0.0
    %1332 = vmatprep.subr.mxu0 0.0
    %1333 = vmatpush1.msra.mxu0 0.0
    %1334 = vmatprep.subr.mxu0 0.0
    %1335 = vmatpush1.msra.mxu0 0.0
    %1336 = vmatprep.subr.mxu0 0.0
    %1337 = vmatpush1.msra.mxu0 0.0
    %1338 = vmatprep.subr.mxu0 0.0
    %1339 = vmatpush1.msra.mxu0 0.0
    %1340 = vmatprep.subr.mxu0 0.0
    %1341 = vmatpush1.msra.mxu0 0.0
    %1342 = vmatprep.subr.mxu0 0.0
    %1343 = vmatpush1.msra.mxu0 0.0
    %1344 = vmatprep.subr.mxu0 0.0
    %1345 = vmatpush1.msra.mxu0 0.0
    %1346 = vmatprep.subr.mxu0 0.0
    %1347 = vmatpush1.msra.mxu0 0.0
    %1348 = vmatprep.subr.mxu0 0.0
    %1349 = vmatpush1.msra.mxu0 0.0
    %1350 = vmatprep.subr.mxu0 0.0
    %1351 = vmatpush1.msra.mxu0 0.0
    %1352 = vmatprep.mubr.f32.mxu0 0.0
    %1353 = vmatmul.mubr.f32.gmra.mrb[0].mxu0 %v1286
    %v1354 = vpop.f32.mrb[0].mxu0
    %v1355 = vadd.f32 0.0, %v1354
    %v1356 = vpop.f32.mrb[0].mxu0
    %1357 = vdwg.mxu0
    %v1358 = vadd.f32 %v1282, %v1355
    %v1359 = vmul.f32 %v1358, %v424
    %v1360 = vtanh.pop %v1359
    %v1361 = vmul.f32 %v1360, %v424
    %v1362 = vadd.f32 %v1361, %v431
    %v1363 = vmul.f32 %v1362, %v1275
    %1365 = vrot.lane.b32.xlu0 %v1362, 64
    %v1366 = vpop.permute.xlu0 %1365
    %v1368 = vmul.f32 %v1362, %v1366
    %1370 = vrot.lane.b32.xlu0 %v1368, 32
    %v1371 = vpop.permute.xlu0 %1370
    %v1373 = vadd.f32 %v1363, %v1371
    %v1374 = vtanh.pop %v1373
    %1376 = vrot.lane.b32.xlu0 %v1374, 64
    %v1377 = vpop.permute.xlu0 %1376
    %v1379 = vmul.f32 %v1362, %v1377
    %v1380 = vadd.f32 %v336, %v1179
    %1382 = vrot.lane.b32.xlu0 %v1379, 32
    %v1383 = vpop.permute.xlu0 %1382
    %v1384 = vsel %vm346, %v1383, 0
    %1386 = vmatprep.subr.mxu0 0.0
    %1387 = vmatpush1.msra.mxu0 %v1180
    %1388 = vmatprep.subr.mxu0 0.0
    %1389 = vmatpush1.msra.mxu0 %v1181
    %1390 = vmatprep.subr.mxu0 0.0
    %1391 = vmatpush1.msra.mxu0 %v1182
    %1392 = vmatprep.subr.mxu0 0.0
    %1393 = vmatpush1.msra.mxu0 %v1183
    %1394 = vmatprep.subr.mxu0 0.0
    %1395 = vmatpush1.msra.mxu0 0.0
    %1396 = vmatprep.subr.mxu0 0.0
    %1397 = vmatpush1.msra.mxu0 0.0
    %1398 = vmatprep.subr.mxu0 0.0
    %1399 = vmatpush1.msra.mxu0 0.0
    %1400 = vmatprep.subr.mxu0 0.0
    %1401 = vmatpush1.msra.mxu0 0.0
    %1402 = vmatprep.subr.mxu0 0.0
    %1403 = vmatpush1.msra.mxu0 0.0
    %1404 = vmatprep.subr.mxu0 0.0
    %1405 = vmatpush1.msra.mxu0 0.0
    %1406 = vmatprep.subr.mxu0 0.0
    %1407 = vmatpush1.msra.mxu0 0.0
    %1408 = vmatprep.subr.mxu0 0.0
    %1409 = vmatpush1.msra.mxu0 0.0
    %1410 = vmatprep.subr.mxu0 0.0
    %1411 = vmatpush1.msra.mxu0 0.0
    %1412 = vmatprep.subr.mxu0 0.0
    %1413 = vmatpush1.msra.mxu0 0.0
    %1414 = vmatprep.subr.mxu0 0.0
    %1415 = vmatpush1.msra.mxu0 0.0
    %1416 = vmatprep.subr.mxu0 0.0
    %1417 = vmatpush1.msra.mxu0 0.0
    %1418 = vmatprep.subr.mxu0 0.0
    %1419 = vmatpush1.msra.mxu0 0.0
    %1420 = vmatprep.subr.mxu0 0.0
    %1421 = vmatpush1.msra.mxu0 0.0
    %1422 = vmatprep.subr.mxu0 0.0
    %1423 = vmatpush1.msra.mxu0 0.0
    %1424 = vmatprep.subr.mxu0 0.0
    %1425 = vmatpush1.msra.mxu0 0.0
    %1426 = vmatprep.subr.mxu0 0.0
    %1427 = vmatpush1.msra.mxu0 0.0
    %1428 = vmatprep.subr.mxu0 0.0
    %1429 = vmatpush1.msra.mxu0 0.0
    %1430 = vmatprep.subr.mxu0 0.0
    %1431 = vmatpush1.msra.mxu0 0.0
    %1432 = vmatprep.subr.mxu0 0.0
    %1433 = vmatpush1.msra.mxu0 0.0
    %1434 = vmatprep.subr.mxu0 0.0
    %1435 = vmatpush1.msra.mxu0 0.0
    %1436 = vmatprep.subr.mxu0 0.0
    %1437 = vmatpush1.msra.mxu0 0.0
    %1438 = vmatprep.subr.mxu0 0.0
    %1439 = vmatpush1.msra.mxu0 0.0
    %1440 = vmatprep.subr.mxu0 0.0
    %1441 = vmatpush1.msra.mxu0 0.0
    %1442 = vmatprep.subr.mxu0 0.0
    %1443 = vmatpush1.msra.mxu0 0.0
    %1444 = vmatprep.subr.mxu0 0.0
    %1445 = vmatpush1.msra.mxu0 0.0
    %1446 = vmatprep.subr.mxu0 0.0
    %1447 = vmatpush1.msra.mxu0 0.0
    %1448 = vmatprep.subr.mxu0 0.0
    %1449 = vmatpush1.msra.mxu0 0.0
    %1450 = vmatprep.mubr.f32.mxu0 0.0
    %1451 = vmatmul.mubr.f32.gmra.mrb[0].mxu0 %v1384
    %v1452 = vpop.f32.mrb[0].mxu0
    %v1453 = vadd.f32 0.0, %v1452
    %v1454 = vpop.f32.mrb[0].mxu0
    %1455 = vdwg.mxu0
    %v1456 = vadd.f32 %v1380, %v1453
    %v1457 = vmul.f32 %v1456, %v424
    %v1458 = vtanh.pop %v1457
    %v1459 = vmul.f32 %v1458, %v424
    %v1460 = vadd.f32 %v1459, %v431
    %v1461 = vmul.f32 %v1460, %v1373
    %1463 = vrot.lane.b32.xlu0 %v1460, 64
    %v1464 = vpop.permute.xlu0 %1463
    %v1466 = vmul.f32 %v1460, %v1464
    %1468 = vrot.lane.b32.xlu0 %v1466, 32
    %v1469 = vpop.permute.xlu0 %1468
    %v1471 = vadd.f32 %v1461, %v1469
    %v1472 = vtanh.pop %v1471
    %1474 = vrot.lane.b32.xlu0 %v1472, 64
    %v1475 = vpop.permute.xlu0 %1474
    %v1477 = vmul.f32 %v1460, %v1475
    %v1478 = vadd.f32 %v337, %v1179
    %1480 = vrot.lane.b32.xlu0 %v1477, 32
    %v1481 = vpop.permute.xlu0 %1480
    %v1482 = vsel %vm346, %v1481, 0
    %1484 = vmatprep.subr.mxu0 0.0
    %1485 = vmatpush1.msra.mxu0 %v1180
    %1486 = vmatprep.subr.mxu0 0.0
    %1487 = vmatpush1.msra.mxu0 %v1181
    %1488 = vmatprep.subr.mxu0 0.0
    %1489 = vmatpush1.msra.mxu0 %v1182
    %1490 = vmatprep.subr.mxu0 0.0
    %1491 = vmatpush1.msra.mxu0 %v1183
    %1492 = vmatprep.subr.mxu0 0.0
    %1493 = vmatpush1.msra.mxu0 0.0
    %1494 = vmatprep.subr.mxu0 0.0
    %1495 = vmatpush1.msra.mxu0 0.0
    %1496 = vmatprep.subr.mxu0 0.0
    %1497 = vmatpush1.msra.mxu0 0.0
    %1498 = vmatprep.subr.mxu0 0.0
    %1499 = vmatpush1.msra.mxu0 0.0
    %1500 = vmatprep.subr.mxu0 0.0
    %1501 = vmatpush1.msra.mxu0 0.0
    %1502 = vmatprep.subr.mxu0 0.0
    %1503 = vmatpush1.msra.mxu0 0.0
    %1504 = vmatprep.subr.mxu0 0.0
    %1505 = vmatpush1.msra.mxu0 0.0
    %1506 = vmatprep.subr.mxu0 0.0
    %1507 = vmatpush1.msra.mxu0 0.0
    %1508 = vmatprep.subr.mxu0 0.0
    %1509 = vmatpush1.msra.mxu0 0.0
    %1510 = vmatprep.subr.mxu0 0.0
    %1511 = vmatpush1.msra.mxu0 0.0
    %1512 = vmatprep.subr.mxu0 0.0
    %1513 = vmatpush1.msra.mxu0 0.0
    %1514 = vmatprep.subr.mxu0 0.0
    %1515 = vmatpush1.msra.mxu0 0.0
    %1516 = vmatprep.subr.mxu0 0.0
    %1517 = vmatpush1.msra.mxu0 0.0
    %1518 = vmatprep.subr.mxu0 0.0
    %1519 = vmatpush1.msra.mxu0 0.0
    %1520 = vmatprep.subr.mxu0 0.0
    %1521 = vmatpush1.msra.mxu0 0.0
    %1522 = vmatprep.subr.mxu0 0.0
    %1523 = vmatpush1.msra.mxu0 0.0
    %1524 = vmatprep.subr.mxu0 0.0
    %1525 = vmatpush1.msra.mxu0 0.0
    %1526 = vmatprep.subr.mxu0 0.0
    %1527 = vmatpush1.msra.mxu0 0.0
    %1528 = vmatprep.subr.mxu0 0.0
    %1529 = vmatpush1.msra.mxu0 0.0
    %1530 = vmatprep.subr.mxu0 0.0
    %1531 = vmatpush1.msra.mxu0 0.0
    %1532 = vmatprep.subr.mxu0 0.0
    %1533 = vmatpush1.msra.mxu0 0.0
    %1534 = vmatprep.subr.mxu0 0.0
    %1535 = vmatpush1.msra.mxu0 0.0
    %1536 = vmatprep.subr.mxu0 0.0
    %1537 = vmatpush1.msra.mxu0 0.0
    %1538 = vmatprep.subr.mxu0 0.0
    %1539 = vmatpush1.msra.mxu0 0.0
    %1540 = vmatprep.subr.mxu0 0.0
    %1541 = vmatpush1.msra.mxu0 0.0
    %1542 = vmatprep.subr.mxu0 0.0
    %1543 = vmatpush1.msra.mxu0 0.0
    %1544 = vmatprep.subr.mxu0 0.0
    %1545 = vmatpush1.msra.mxu0 0.0
    %1546 = vmatprep.subr.mxu0 0.0
    %1547 = vmatpush1.msra.mxu0 0.0
    %1548 = vmatprep.mubr.f32.mxu0 0.0
    %1549 = vmatmul.mubr.f32.gmra.mrb[0].mxu0 %v1482
    %v1550 = vpop.f32.mrb[0].mxu0
    %v1551 = vadd.f32 0.0, %v1550
    %v1552 = vpop.f32.mrb[0].mxu0
    %1553 = vdwg.mxu0
    %v1554 = vadd.f32 %v1478, %v1551
    %v1555 = vmul.f32 %v1554, %v424
    %v1556 = vtanh.pop %v1555
    %v1557 = vmul.f32 %v1556, %v424
    %v1558 = vadd.f32 %v1557, %v431
    %v1559 = vmul.f32 %v1558, %v1471
    %1561 = vrot.lane.b32.xlu0 %v1558, 64
    %v1562 = vpop.permute.xlu0 %1561
    %v1564 = vmul.f32 %v1558, %v1562
    %1566 = vrot.lane.b32.xlu0 %v1564, 32
    %v1567 = vpop.permute.xlu0 %1566
    %v1569 = vadd.f32 %v1559, %v1567
    %v1570 = vtanh.pop %v1569
    %1572 = vrot.lane.b32.xlu0 %v1570, 64
    %v1573 = vpop.permute.xlu0 %1572
    %v1575 = vmul.f32 %v1558, %v1573
    %v1576 = vadd.f32 %v338, %v1179
    %1578 = vrot.lane.b32.xlu0 %v1575, 32
    %v1579 = vpop.permute.xlu0 %1578
    %v1580 = vsel %vm346, %v1579, 0
    %1582 = vmatprep.subr.mxu0 0.0
    %1583 = vmatpush1.msra.mxu0 %v1180
    %1584 = vmatprep.subr.mxu0 0.0
    %1585 = vmatpush1.msra.mxu0 %v1181
    %1586 = vmatprep.subr.mxu0 0.0
    %1587 = vmatpush1.msra.mxu0 %v1182
    %1588 = vmatprep.subr.mxu0 0.0
    %1589 = vmatpush1.msra.mxu0 %v1183
    %1590 = vmatprep.subr.mxu0 0.0
    %1591 = vmatpush1.msra.mxu0 0.0
    %1592 = vmatprep.subr.mxu0 0.0
    %1593 = vmatpush1.msra.mxu0 0.0
    %1594 = vmatprep.subr.mxu0 0.0
    %1595 = vmatpush1.msra.mxu0 0.0
    %1596 = vmatprep.subr.mxu0 0.0
    %1597 = vmatpush1.msra.mxu0 0.0
    %1598 = vmatprep.subr.mxu0 0.0
    %1599 = vmatpush1.msra.mxu0 0.0
    %1600 = vmatprep.subr.mxu0 0.0
    %1601 = vmatpush1.msra.mxu0 0.0
    %1602 = vmatprep.subr.mxu0 0.0
    %1603 = vmatpush1.msra.mxu0 0.0
    %1604 = vmatprep.subr.mxu0 0.0
    %1605 = vmatpush1.msra.mxu0 0.0
    %1606 = vmatprep.subr.mxu0 0.0
    %1607 = vmatpush1.msra.mxu0 0.0
    %1608 = vmatprep.subr.mxu0 0.0
    %1609 = vmatpush1.msra.mxu0 0.0
    %1610 = vmatprep.subr.mxu0 0.0
    %1611 = vmatpush1.msra.mxu0 0.0
    %1612 = vmatprep.subr.mxu0 0.0
    %1613 = vmatpush1.msra.mxu0 0.0
    %1614 = vmatprep.subr.mxu0 0.0
    %1615 = vmatpush1.msra.mxu0 0.0
    %1616 = vmatprep.subr.mxu0 0.0
    %1617 = vmatpush1.msra.mxu0 0.0
    %1618 = vmatprep.subr.mxu0 0.0
    %1619 = vmatpush1.msra.mxu0 0.0
    %1620 = vmatprep.subr.mxu0 0.0
    %1621 = vmatpush1.msra.mxu0 0.0
    %1622 = vmatprep.subr.mxu0 0.0
    %1623 = vmatpush1.msra.mxu0 0.0
    %1624 = vmatprep.subr.mxu0 0.0
    %1625 = vmatpush1.msra.mxu0 0.0
    %1626 = vmatprep.subr.mxu0 0.0
    %1627 = vmatpush1.msra.mxu0 0.0
    %1628 = vmatprep.subr.mxu0 0.0
    %1629 = vmatpush1.msra.mxu0 0.0
    %1630 = vmatprep.subr.mxu0 0.0
    %1631 = vmatpush1.msra.mxu0 0.0
    %1632 = vmatprep.subr.mxu0 0.0
    %1633 = vmatpush1.msra.mxu0 0.0
    %1634 = vmatprep.subr.mxu0 0.0
    %1635 = vmatpush1.msra.mxu0 0.0
    %1636 = vmatprep.subr.mxu0 0.0
    %1637 = vmatpush1.msra.mxu0 0.0
    %1638 = vmatprep.subr.mxu0 0.0
    %1639 = vmatpush1.msra.mxu0 0.0
    %1640 = vmatprep.subr.mxu0 0.0
    %1641 = vmatpush1.msra.mxu0 0.0
    %1642 = vmatprep.subr.mxu0 0.0
    %1643 = vmatpush1.msra.mxu0 0.0
    %1644 = vmatprep.subr.mxu0 0.0
    %1645 = vmatpush1.msra.mxu0 0.0
    %1646 = vmatprep.mubr.f32.mxu0 0.0
    %1647 = vmatmul.mubr.f32.gmra.mrb[0].mxu0 %v1580
    %v1648 = vpop.f32.mrb[0].mxu0
    %v1649 = vadd.f32 0.0, %v1648
    %v1650 = vpop.f32.mrb[0].mxu0
    %1651 = vdwg.mxu0
    %v1652 = vadd.f32 %v1576, %v1649
    %v1653 = vmul.f32 %v1652, %v424
    %v1654 = vtanh.pop %v1653
    %v1655 = vmul.f32 %v1654, %v424
    %v1656 = vadd.f32 %v1655, %v431
    %v1657 = vmul.f32 %v1656, %v1569
    %1659 = vrot.lane.b32.xlu0 %v1656, 64
    %v1660 = vpop.permute.xlu0 %1659
    %v1662 = vmul.f32 %v1656, %v1660
    %1664 = vrot.lane.b32.xlu0 %v1662, 32
    %v1665 = vpop.permute.xlu0 %1664
    %v1667 = vadd.f32 %v1657, %v1665
    %v1668 = vtanh.pop %v1667
    %1670 = vrot.lane.b32.xlu0 %v1668, 64
    %v1671 = vpop.permute.xlu0 %1670
    %v1673 = vmul.f32 %v1656, %v1671
    %v1674 = vadd.f32 %v339, %v1179
    %1676 = vrot.lane.b32.xlu0 %v1673, 32
    %v1677 = vpop.permute.xlu0 %1676
    %v1678 = vsel %vm346, %v1677, 0
    %1680 = vmatprep.subr.mxu0 0.0
    %1681 = vmatpush1.msra.mxu0 %v1180
    %1682 = vmatprep.subr.mxu0 0.0
    %1683 = vmatpush1.msra.mxu0 %v1181
    %1684 = vmatprep.subr.mxu0 0.0
    %1685 = vmatpush1.msra.mxu0 %v1182
    %1686 = vmatprep.subr.mxu0 0.0
    %1687 = vmatpush1.msra.mxu0 %v1183
    %1688 = vmatprep.subr.mxu0 0.0
    %1689 = vmatpush1.msra.mxu0 0.0
    %1690 = vmatprep.subr.mxu0 0.0
    %1691 = vmatpush1.msra.mxu0 0.0
    %1692 = vmatprep.subr.mxu0 0.0
    %1693 = vmatpush1.msra.mxu0 0.0
    %1694 = vmatprep.subr.mxu0 0.0
    %1695 = vmatpush1.msra.mxu0 0.0
    %1696 = vmatprep.subr.mxu0 0.0
    %1697 = vmatpush1.msra.mxu0 0.0
    %1698 = vmatprep.subr.mxu0 0.0
    %1699 = vmatpush1.msra.mxu0 0.0
    %1700 = vmatprep.subr.mxu0 0.0
    %1701 = vmatpush1.msra.mxu0 0.0
    %1702 = vmatprep.subr.mxu0 0.0
    %1703 = vmatpush1.msra.mxu0 0.0
    %1704 = vmatprep.subr.mxu0 0.0
    %1705 = vmatpush1.msra.mxu0 0.0
    %1706 = vmatprep.subr.mxu0 0.0
    %1707 = vmatpush1.msra.mxu0 0.0
    %1708 = vmatprep.subr.mxu0 0.0
    %1709 = vmatpush1.msra.mxu0 0.0
    %1710 = vmatprep.subr.mxu0 0.0
    %1711 = vmatpush1.msra.mxu0 0.0
    %1712 = vmatprep.subr.mxu0 0.0
    %1713 = vmatpush1.msra.mxu0 0.0
    %1714 = vmatprep.subr.mxu0 0.0
    %1715 = vmatpush1.msra.mxu0 0.0
    %1716 = vmatprep.subr.mxu0 0.0
    %1717 = vmatpush1.msra.mxu0 0.0
    %1718 = vmatprep.subr.mxu0 0.0
    %1719 = vmatpush1.msra.mxu0 0.0
    %1720 = vmatprep.subr.mxu0 0.0
    %1721 = vmatpush1.msra.mxu0 0.0
    %1722 = vmatprep.subr.mxu0 0.0
    %1723 = vmatpush1.msra.mxu0 0.0
    %1724 = vmatprep.subr.mxu0 0.0
    %1725 = vmatpush1.msra.mxu0 0.0
    %1726 = vmatprep.subr.mxu0 0.0
    %1727 = vmatpush1.msra.mxu0 0.0
    %1728 = vmatprep.subr.mxu0 0.0
    %1729 = vmatpush1.msra.mxu0 0.0
    %1730 = vmatprep.subr.mxu0 0.0
    %1731 = vmatpush1.msra.mxu0 0.0
    %1732 = vmatprep.subr.mxu0 0.0
    %1733 = vmatpush1.msra.mxu0 0.0
    %1734 = vmatprep.subr.mxu0 0.0
    %1735 = vmatpush1.msra.mxu0 0.0
    %1736 = vmatprep.subr.mxu0 0.0
    %1737 = vmatpush1.msra.mxu0 0.0
    %1738 = vmatprep.subr.mxu0 0.0
    %1739 = vmatpush1.msra.mxu0 0.0
    %1740 = vmatprep.subr.mxu0 0.0
    %1741 = vmatpush1.msra.mxu0 0.0
    %1742 = vmatprep.subr.mxu0 0.0
    %1743 = vmatpush1.msra.mxu0 0.0
    %1744 = vmatprep.mubr.f32.mxu0 0.0
    %1745 = vmatmul.mubr.f32.gmra.mrb[0].mxu0 %v1678
    %v1746 = vpop.f32.mrb[0].mxu0
    %v1747 = vadd.f32 0.0, %v1746
    %v1748 = vpop.f32.mrb[0].mxu0
    %1749 = vdwg.mxu0
    %v1750 = vadd.f32 %v1674, %v1747
    %v1751 = vmul.f32 %v1750, %v424
    %v1752 = vtanh.pop %v1751
    %v1753 = vmul.f32 %v1752, %v424
    %v1754 = vadd.f32 %v1753, %v431
    %v1755 = vmul.f32 %v1754, %v1667
    %1757 = vrot.lane.b32.xlu0 %v1754, 64
    %v1758 = vpop.permute.xlu0 %1757
    %v1760 = vmul.f32 %v1754, %v1758
    %1762 = vrot.lane.b32.xlu0 %v1760, 32
    %v1763 = vpop.permute.xlu0 %1762
    %v1765 = vadd.f32 %v1755, %v1763
    %v1766 = vtanh.pop %v1765
    %1768 = vrot.lane.b32.xlu0 %v1766, 64
    %v1769 = vpop.permute.xlu0 %1768
    %v1771 = vmul.f32 %v1754, %v1769
    %v1772 = vadd.f32 %v340, %v1179
    %1774 = vrot.lane.b32.xlu0 %v1771, 32
    %v1775 = vpop.permute.xlu0 %1774
    %v1776 = vsel %vm346, %v1775, 0
    %1778 = vmatprep.subr.mxu0 0.0
    %1779 = vmatpush1.msra.mxu0 %v1180
    %1780 = vmatprep.subr.mxu0 0.0
    %1781 = vmatpush1.msra.mxu0 %v1181
    %1782 = vmatprep.subr.mxu0 0.0
    %1783 = vmatpush1.msra.mxu0 %v1182
    %1784 = vmatprep.subr.mxu0 0.0
    %1785 = vmatpush1.msra.mxu0 %v1183
    %1786 = vmatprep.subr.mxu0 0.0
    %1787 = vmatpush1.msra.mxu0 0.0
    %1788 = vmatprep.subr.mxu0 0.0
    %1789 = vmatpush1.msra.mxu0 0.0
    %1790 = vmatprep.subr.mxu0 0.0
    %1791 = vmatpush1.msra.mxu0 0.0
    %1792 = vmatprep.subr.mxu0 0.0
    %1793 = vmatpush1.msra.mxu0 0.0
    %1794 = vmatprep.subr.mxu0 0.0
    %1795 = vmatpush1.msra.mxu0 0.0
    %1796 = vmatprep.subr.mxu0 0.0
    %1797 = vmatpush1.msra.mxu0 0.0
    %1798 = vmatprep.subr.mxu0 0.0
    %1799 = vmatpush1.msra.mxu0 0.0
    %1800 = vmatprep.subr.mxu0 0.0
    %1801 = vmatpush1.msra.mxu0 0.0
    %1802 = vmatprep.subr.mxu0 0.0
    %1803 = vmatpush1.msra.mxu0 0.0
    %1804 = vmatprep.subr.mxu0 0.0
    %1805 = vmatpush1.msra.mxu0 0.0
    %1806 = vmatprep.subr.mxu0 0.0
    %1807 = vmatpush1.msra.mxu0 0.0
    %1808 = vmatprep.subr.mxu0 0.0
    %1809 = vmatpush1.msra.mxu0 0.0
    %1810 = vmatprep.subr.mxu0 0.0
    %1811 = vmatpush1.msra.mxu0 0.0
    %1812 = vmatprep.subr.mxu0 0.0
    %1813 = vmatpush1.msra.mxu0 0.0
    %1814 = vmatprep.subr.mxu0 0.0
    %1815 = vmatpush1.msra.mxu0 0.0
    %1816 = vmatprep.subr.mxu0 0.0
    %1817 = vmatpush1.msra.mxu0 0.0
    %1818 = vmatprep.subr.mxu0 0.0
    %1819 = vmatpush1.msra.mxu0 0.0
    %1820 = vmatprep.subr.mxu0 0.0
    %1821 = vmatpush1.msra.mxu0 0.0
    %1822 = vmatprep.subr.mxu0 0.0
    %1823 = vmatpush1.msra.mxu0 0.0
    %1824 = vmatprep.subr.mxu0 0.0
    %1825 = vmatpush1.msra.mxu0 0.0
    %1826 = vmatprep.subr.mxu0 0.0
    %1827 = vmatpush1.msra.mxu0 0.0
    %1828 = vmatprep.subr.mxu0 0.0
    %1829 = vmatpush1.msra.mxu0 0.0
    %1830 = vmatprep.subr.mxu0 0.0
    %1831 = vmatpush1.msra.mxu0 0.0
    %1832 = vmatprep.subr.mxu0 0.0
    %1833 = vmatpush1.msra.mxu0 0.0
    %1834 = vmatprep.subr.mxu0 0.0
    %1835 = vmatpush1.msra.mxu0 0.0
    %1836 = vmatprep.subr.mxu0 0.0
    %1837 = vmatpush1.msra.mxu0 0.0
    %1838 = vmatprep.subr.mxu0 0.0
    %1839 = vmatpush1.msra.mxu0 0.0
    %1840 = vmatprep.subr.mxu0 0.0
    %1841 = vmatpush1.msra.mxu0 0.0
    %1842 = vmatprep.mubr.f32.mxu0 0.0
    %1843 = vmatmul.mubr.f32.gmra.mrb[0].mxu0 %v1776
    %v1844 = vpop.f32.mrb[0].mxu0
    %v1845 = vadd.f32 0.0, %v1844
    %v1846 = vpop.f32.mrb[0].mxu0
    %1847 = vdwg.mxu0
    %v1848 = vadd.f32 %v1772, %v1845
    %v1849 = vmul.f32 %v1848, %v424
    %v1850 = vtanh.pop %v1849
    %v1851 = vmul.f32 %v1850, %v424
    %v1852 = vadd.f32 %v1851, %v431
    %v1853 = vmul.f32 %v1852, %v1765
    %1855 = vrot.lane.b32.xlu0 %v1852, 64
    %v1856 = vpop.permute.xlu0 %1855
    %v1858 = vmul.f32 %v1852, %v1856
    %1860 = vrot.lane.b32.xlu0 %v1858, 32
    %v1861 = vpop.permute.xlu0 %1860
    %v1863 = vadd.f32 %v1853, %v1861
    %v1864 = vtanh.pop %v1863
    %1866 = vrot.lane.b32.xlu0 %v1864, 64
    %v1867 = vpop.permute.xlu0 %1866
    %v1869 = vmul.f32 %v1852, %v1867
    %v1870 = vadd.f32 %v341, %v1179
    %1872 = vrot.lane.b32.xlu0 %v1869, 32
    %v1873 = vpop.permute.xlu0 %1872
    %v1874 = vsel %vm346, %v1873, 0
    %1876 = vmatprep.subr.mxu0 0.0
    %1877 = vmatpush1.msra.mxu0 %v1180
    %1878 = vmatprep.subr.mxu0 0.0
    %1879 = vmatpush1.msra.mxu0 %v1181
    %1880 = vmatprep.subr.mxu0 0.0
    %1881 = vmatpush1.msra.mxu0 %v1182
    %1882 = vmatprep.subr.mxu0 0.0
    %1883 = vmatpush1.msra.mxu0 %v1183
    %1884 = vmatprep.subr.mxu0 0.0
    %1885 = vmatpush1.msra.mxu0 0.0
    %1886 = vmatprep.subr.mxu0 0.0
    %1887 = vmatpush1.msra.mxu0 0.0
    %1888 = vmatprep.subr.mxu0 0.0
    %1889 = vmatpush1.msra.mxu0 0.0
    %1890 = vmatprep.subr.mxu0 0.0
    %1891 = vmatpush1.msra.mxu0 0.0
    %1892 = vmatprep.subr.mxu0 0.0
    %1893 = vmatpush1.msra.mxu0 0.0
    %1894 = vmatprep.subr.mxu0 0.0
    %1895 = vmatpush1.msra.mxu0 0.0
    %1896 = vmatprep.subr.mxu0 0.0
    %1897 = vmatpush1.msra.mxu0 0.0
    %1898 = vmatprep.subr.mxu0 0.0
    %1899 = vmatpush1.msra.mxu0 0.0
    %1900 = vmatprep.subr.mxu0 0.0
    %1901 = vmatpush1.msra.mxu0 0.0
    %1902 = vmatprep.subr.mxu0 0.0
    %1903 = vmatpush1.msra.mxu0 0.0
    %1904 = vmatprep.subr.mxu0 0.0
    %1905 = vmatpush1.msra.mxu0 0.0
    %1906 = vmatprep.subr.mxu0 0.0
    %1907 = vmatpush1.msra.mxu0 0.0
    %1908 = vmatprep.subr.mxu0 0.0
    %1909 = vmatpush1.msra.mxu0 0.0
    %1910 = vmatprep.subr.mxu0 0.0
    %1911 = vmatpush1.msra.mxu0 0.0
    %1912 = vmatprep.subr.mxu0 0.0
    %1913 = vmatpush1.msra.mxu0 0.0
    %1914 = vmatprep.subr.mxu0 0.0
    %1915 = vmatpush1.msra.mxu0 0.0
    %1916 = vmatprep.subr.mxu0 0.0
    %1917 = vmatpush1.msra.mxu0 0.0
    %1918 = vmatprep.subr.mxu0 0.0
    %1919 = vmatpush1.msra.mxu0 0.0
    %1920 = vmatprep.subr.mxu0 0.0
    %1921 = vmatpush1.msra.mxu0 0.0
    %1922 = vmatprep.subr.mxu0 0.0
    %1923 = vmatpush1.msra.mxu0 0.0
    %1924 = vmatprep.subr.mxu0 0.0
    %1925 = vmatpush1.msra.mxu0 0.0
    %1926 = vmatprep.subr.mxu0 0.0
    %1927 = vmatpush1.msra.mxu0 0.0
    %1928 = vmatprep.subr.mxu0 0.0
    %1929 = vmatpush1.msra.mxu0 0.0
    %1930 = vmatprep.subr.mxu0 0.0
    %1931 = vmatpush1.msra.mxu0 0.0
    %1932 = vmatprep.subr.mxu0 0.0
    %1933 = vmatpush1.msra.mxu0 0.0
    %1934 = vmatprep.subr.mxu0 0.0
    %1935 = vmatpush1.msra.mxu0 0.0
    %1936 = vmatprep.subr.mxu0 0.0
    %1937 = vmatpush1.msra.mxu0 0.0
    %1938 = vmatprep.subr.mxu0 0.0
    %1939 = vmatpush1.msra.mxu0 0.0
    %1940 = vmatprep.mubr.f32.mxu0 0.0
    %1941 = vmatmul.mubr.f32.gmra.mrb[0].mxu0 %v1874
    %v1942 = vpop.f32.mrb[0].mxu0
    %v1943 = vadd.f32 0.0, %v1942
    %v1944 = vpop.f32.mrb[0].mxu0
    %1945 = vdwg.mxu0
    %v1946 = vadd.f32 %v1870, %v1943
    %v1947 = vmul.f32 %v1946, %v424
    %v1948 = vtanh.pop %v1947
    %v1949 = vmul.f32 %v1948, %v424
    %v1950 = vadd.f32 %v1949, %v431
    %v1951 = vmul.f32 %v1950, %v1863
    %1953 = vrot.lane.b32.xlu0 %v1950, 64
    %v1954 = vpop.permute.xlu0 %1953
    %v1956 = vmul.f32 %v1950, %v1954
    %1958 = vrot.lane.b32.xlu0 %v1956, 32
    %v1959 = vpop.permute.xlu0 %1958
    %v1961 = vadd.f32 %v1951, %v1959
    %v1962 = vtanh.pop %v1961
    %1964 = vrot.lane.b32.xlu0 %v1962, 64
    %v1965 = vpop.permute.xlu0 %1964
    %v1967 = vmul.f32 %v1950, %v1965
    %v1968 = vld [vmem:[#allocation4 + $0x64] sm:$0x1]
    %v1969 = vld [vmem:[#allocation4 + $0x65] sm:$0x1]
    %v1970 = vlaneseq
    %v1971 = vshrl.u32 %v1970, 7
    %v1972 = vsub.s32 0, %v1971
    %v1973 = vrot.slane %v1968, %v1972
    %1975 = vrot.lane.b32.xlu0 %v1973, 96
    %v1976 = vpop.permute.xlu0 %1975
    %v1978 = vmul.f32 %v1967, %v1976
    %1980 = vrot.lane.b32.xlu0 %v1978, 32
    %v1981 = vpop.permute.xlu0 %1980
    %v1983 = vsel %vm346, %v1981, 0.0
    %1984 = vadd.xlane.f32.xlu0 %v1983
    %v1985 = vpop.xlane.xlu0 %1984
    %v1986 = vlaneseq
    %v1987 = vshrl.u32 %v1986, 7
    %v1988 = vsub.s32 0, %v1987
    %v1989 = vrot.slane %v1969, %v1988
    %v1990 = vmul.f32 %v1164, %v1989
    %v1991 = vsel %vm346, %v1990, 0.0
    %1992 = vadd.xlane.f32.xlu0 %v1991
    %v1993 = vpop.xlane.xlu0 %1992
    %v1994 = vadd.f32 %v1985, %v1993
    %v1995 = vadd.f32 %v1994, %v265
    %1997 = vrot.lane.b32.xlu0 %v1995, 126
    %v1998 = vpop.permute.xlu0 %1997
    %vm2000 = vcmask 7168
    %2001 = vst.msk [vmem:[%s2] sm:$0xff] %vm2000, %v1998
    // Predicated region
    $region18: #{tpu_custom_call.1} parent=1 // pred_check
      _
    $region19: #{tpu_custom_call.1} parent=1 // pred_check_branch
      %2003 = sbr.rel (0) target = $region21
    $region20: #{tpu_custom_call.1} parent=1 // pred_region
      _
    $region21: #{tpu_custom_call.1} parent=1 // pred_fallthru
      _
    // Predicated region
    $region22: #{tpu_custom_call.1} parent=1 // pred_check
      _
    $region23: #{tpu_custom_call.1} parent=1 // pred_check_branch
      %2005 = sbr.rel (0) target = $region25
    $region24: #{tpu_custom_call.1} parent=1 // pred_region
      _
    $region25: #{tpu_custom_call.1} parent=1 // pred_fallthru
      _
    %2006 = vsyncpa [#allocation3], 1
    %2007 = vsyncpa [#allocation5], 1

</llo_original>
